<compile_context>
chip_gen: v6e
topology: v6e:2x2x1
jax: 0.10.0
libtpu: 0.0.40
codegen_flags: <defaults>
</compile_context>

<pallas_src>
import jax
import jax.numpy as jnp
from jax import lax
from jax.experimental import pallas as pl
from jax.experimental.pallas import tpu as pltpu


def _round_up(x, m):
    return ((x + m - 1) // m) * m


def _make_lstm2_kernel(S, B_pad, H, V_pad):
    """Builds the fused embedding + 2-layer LSTM kernel for static (S, B_pad, H, V_pad)."""
    N = S * B_pad          # time-major flattened token count
    G = 4 * H              # fused gate width (i,f,g,o) -> 128 lanes for H=32

    def kernel(ids_ref,    # (N, 1)     int32  time-major flattened token ids
               tab_ref,    # (V_pad, G) f32    Embed @ W_ih0^T + (b_ih0 + b_hh0)
               whh0_ref,   # (H, G)     f32
               w1_ref,     # (2H, G)    f32    [W_ih1^T ; W_hh1^T]
               b1_ref,     # (1, G)     f32    b_ih1 + b_hh1
               out_ref):   # (B_pad, 2H) f32   [c0 | c1]
        # ---- fused embedding lookup + hoisted layer-0 input projection (one matmul) ----
        ids = ids_ref[...]                                        # (N, 1)
        vocab_iota = lax.broadcasted_iota(jnp.int32, (N, V_pad), 1)
        onehot = (vocab_iota == ids).astype(jnp.float32)          # (N, V_pad)
        # bias b0 is folded into the table rows; zero pad rows are never selected.
        xg0 = jnp.dot(onehot, tab_ref[...],
                      preferred_element_type=jnp.float32)         # (N, G)

        whh0 = whh0_ref[...]                                      # (H, G)
        w1 = w1_ref[...]                                          # (2H, G)
        b1 = jnp.broadcast_to(b1_ref[...], (B_pad, G))            # hoisted broadcast

        def gate_math(gates, c_prev):
            # full-width EUP ops (one sigmoid, one tanh over (B,4H)), then lane slices
            sig = jax.nn.sigmoid(gates)
            th = jnp.tanh(gates)
            i_g = sig[:, 0 * H:1 * H]
            f_g = sig[:, 1 * H:2 * H]
            g_g = th[:, 2 * H:3 * H]
            o_g = sig[:, 3 * H:4 * H]
            c_new = f_g * c_prev + i_g * g_g
            h_new = o_g * jnp.tanh(c_new)
            return h_new, c_new

        zeros = jnp.zeros((B_pad, H), jnp.float32)
        h0, c0, h1, c1 = zeros, zeros, zeros, zeros

        # S is small and static -> fully unrolled recurrence, static sublane-aligned slices.
        for t in range(S):
            xg_t = xg0[t * B_pad:(t + 1) * B_pad, :]              # (B_pad, G), static slice
            gates0 = xg_t + jnp.dot(h0, whh0,
                                    preferred_element_type=jnp.float32)
            h0, c0 = gate_math(gates0, c0)

            lhs1 = jnp.concatenate([h0, h1], axis=1)              # (B_pad, 2H)
            gates1 = jnp.dot(lhs1, w1,
                             preferred_element_type=jnp.float32) + b1
            h1, c1 = gate_math(gates1, c1)

        out_ref[...] = jnp.concatenate([c0, c1], axis=1)          # lane-packed store

    return kernel


def lstm2_cell_states(ids_tm, tab, whh0_t, w1, b1, *, S, B_pad, H, V_pad):
    """ids_tm: (S*B_pad, 1) int32. Returns packed cell states (B_pad, 2H) f32."""
    vmem = pl.BlockSpec(memory_space=pltpu.MemorySpace.VMEM)
    kernel = _make_lstm2_kernel(S, B_pad, H, V_pad)
    return pl.pallas_call(
        kernel,
        out_shape=jax.ShapeDtypeStruct((B_pad, 2 * H), jnp.float32),
        in_specs=[vmem] * 5,
        out_specs=vmem,
    )(ids_tm, tab, whh0_t, w1, b1)


class EmbeddingTextEncoderPallas:
    """JAX/Pallas port of the PyTorch EmbeddingTextEncoder forward pass (eval mode)."""

    def __init__(self, embedding_dim=32, hidden_size=32, num_layers=2,
                 vocab_size=322, pad_idx=0, key=None):
        assert num_layers == 2, "kernel is specialized for num_layers=2"
        self.embedding_dim = embedding_dim
        self.hidden_size = hidden_size
        self.num_layers = num_layers
        self.vocab_size = vocab_size
        self.pad_idx = pad_idx

        key = jax.random.PRNGKey(0) if key is None else key
        ks = jax.random.split(key, 9)
        H, E, V = hidden_size, embedding_dim, vocab_size
        scale = 0.1

        emb = scale * jax.random.normal(ks[0], (V, E), jnp.float32)
        # padding_idx row is zero (as in nn.Embedding(padding_idx=pad_idx))
        self.embedding = emb.at[pad_idx].set(0.0)

        # PyTorch LSTM params: weight_ih_l0 (4H,E), weight_hh_l0 (4H,H), biases (4H,)
        self.w_ih0 = scale * jax.random.normal(ks[1], (4 * H, E), jnp.float32)
        self.w_hh0 = scale * jax.random.normal(ks[2], (4 * H, H), jnp.float32)
        self.b_ih0 = scale * jax.random.normal(ks[3], (4 * H,), jnp.float32)
        self.b_hh0 = scale * jax.random.normal(ks[4], (4 * H,), jnp.float32)
        self.w_ih1 = scale * jax.random.normal(ks[5], (4 * H, H), jnp.float32)
        self.w_hh1 = scale * jax.random.normal(ks[6], (4 * H, H), jnp.float32)
        self.b_ih1 = scale * jax.random.normal(ks[7], (4 * H,), jnp.float32)
        self.b_hh1 = scale * jax.random.normal(ks[8], (4 * H,), jnp.float32)

        # ---- kernel-friendly pre-packed parameters ----
        # token -> layer-0 gate preactivation table (bias folded in), vocab padded to 128x
        self.V_pad = _round_up(V, 128)
        tab = self.embedding @ self.w_ih0.T + (self.b_ih0 + self.b_hh0)   # (V, 4H)
        self.tok2gates0 = jnp.zeros((self.V_pad, 4 * H), jnp.float32).at[:V].set(tab)
        self.whh0_t = self.w_hh0.T                                        # (H, 4H)
        self.w1 = jnp.concatenate([self.w_ih1.T, self.w_hh1.T], axis=0)   # (2H, 4H)
        self.b1 = (self.b_ih1 + self.b_hh1).reshape(1, 4 * H)

        self._forward = jax.jit(self._forward_impl)

    def _forward_impl(self, x):
        # x: (B, S) int32 token ids
        B, S = x.shape
        H = self.hidden_size
        B_pad = max(8, _round_up(B, 8))     # pad batch to f32 sublane width

        x_pad = jnp.full((B_pad, S), self.pad_idx, dtype=jnp.int32)
        x_pad = x_pad.at[:B].set(x.astype(jnp.int32))
        ids_tm = jnp.transpose(x_pad, (1, 0)).reshape(S * B_pad, 1)   # time-major flat

        packed = lstm2_cell_states(ids_tm, self.tok2gates0, self.whh0_t,
                                   self.w1, self.b1,
                                   S=S, B_pad=B_pad, H=H, V_pad=self.V_pad)
        c0 = packed[:B, :H]
        c1 = packed[:B, H:2 * H]
        return jnp.stack([c0, c1], axis=0)                            # (2, B, H)

    def __call__(self, x):
        return self._forward(x)


def _reference_forward(model, x):
    """Pure-JAX reference of the same forward pass (for validation)."""
    H = model.hidden_size
    embed_x = jnp.take(model.embedding, x, axis=0)                    # (B, S, E)
    B, S, _ = embed_x.shape

    def cell(x_t, h, c, w_ih, w_hh, b_ih, b_hh):
        g = x_t @ w_ih.T + h @ w_hh.T + b_ih + b_hh
        i = jax.nn.sigmoid(g[:, :H]); f = jax.nn.sigmoid(g[:, H:2 * H])
        gg = jnp.tanh(g[:, 2 * H:3 * H]); o = jax.nn.sigmoid(g[:, 3 * H:])
        c = f * c + i * gg
        return o * jnp.tanh(c), c

    h0 = c0 = h1 = c1 = jnp.zeros((B, H), jnp.float32)
    for t in range(S):
        h0, c0 = cell(embed_x[:, t, :], h0, c0,
                      model.w_ih0, model.w_hh0, model.b_ih0, model.b_hh0)
        h1, c1 = cell(h0, h1, c1,
                      model.w_ih1, model.w_hh1, model.b_ih1, model.b_hh1)
    return jnp.stack([c0, c1], axis=0)


if __name__ == "__main__":
    key = jax.random.PRNGKey(0)
    k_params, k_tokens = jax.random.split(key)

    # Small shapes consistent with the module: batch=2, seq=8,
    # embedding_dim=32, hidden_size=32, num_layers=2, vocab_size=322.
    B, S = 2, 8
    model = EmbeddingTextEncoderPallas(embedding_dim=32, hidden_size=32,
                                       num_layers=2, vocab_size=322,
                                       pad_idx=0, key=k_params)

    x = jax.random.randint(k_tokens, (B, S), 0, model.vocab_size, dtype=jnp.int32)

    cell_states = jax.block_until_ready(model(x))

    ref = _reference_forward(model, x)
    assert cell_states.shape == (2, B, model.hidden_size)
    assert jnp.allclose(cell_states, ref, atol=1e-4, rtol=1e-4)

    print("KERNEL_OK")
</pallas_src>

<mosaic_0001>
module attributes {stable_mosaic.version = 11 : i64} {
  func.func @kernel(%arg0: memref<64x1xi32, #tpu.memory_space<vmem>>, %arg1: memref<384x128xf32, #tpu.memory_space<vmem>>, %arg2: memref<32x128xf32, #tpu.memory_space<vmem>>, %arg3: memref<64x128xf32, #tpu.memory_space<vmem>>, %arg4: memref<1x128xf32, #tpu.memory_space<vmem>>, %arg5: memref<8x64xf32, #tpu.memory_space<vmem>>) attributes {dimension_semantics = [], scalar_prefetch = 0 : i64, scratch_operands = 0 : i64, tpu.core_type = #tpu.core_type<tc>} {
    %c0 = arith.constant 0 : index
    %c0_0 = arith.constant 0 : index
    %0 = vector.load %arg0[%c0, %c0_0] : memref<64x1xi32, #tpu.memory_space<vmem>>, vector<64x1xi32>
    %1 = tpu.iota {dimensions = array<i32: 1>} : vector<64x384xi32>
    %2 = vector.broadcast %0 : vector<64x1xi32> to vector<64x384xi32>
    %3 = arith.cmpi eq, %1, %2 : vector<64x384xi32>
    %4 = arith.extui %3 : vector<64x384xi1> to vector<64x384xi32>
    %5 = arith.sitofp %4 : vector<64x384xi32> to vector<64x384xf32>
    %c0_1 = arith.constant 0 : index
    %c0_2 = arith.constant 0 : index
    %6 = vector.load %arg1[%c0_1, %c0_2] : memref<384x128xf32, #tpu.memory_space<vmem>>, vector<384x128xf32>
    %cst = arith.constant dense<0.000000e+00> : vector<64x128xf32>
    %7 = tpu.matmul %5, %6, %cst {dimension_numbers = #tpu.dot_dimension_numbers<[1], [0], [0], [1], [0, 0, 1, 1], [], []>} : vector<64x384xf32>, vector<384x128xf32>, vector<64x128xf32> -> vector<64x128xf32>
    %c0_3 = arith.constant 0 : index
    %c0_4 = arith.constant 0 : index
    %8 = vector.load %arg2[%c0_3, %c0_4] : memref<32x128xf32, #tpu.memory_space<vmem>>, vector<32x128xf32>
    %c0_5 = arith.constant 0 : index
    %c0_6 = arith.constant 0 : index
    %9 = vector.load %arg3[%c0_5, %c0_6] : memref<64x128xf32, #tpu.memory_space<vmem>>, vector<64x128xf32>
    %c0_7 = arith.constant 0 : index
    %c0_8 = arith.constant 0 : index
    %10 = vector.load %arg4[%c0_7, %c0_8] : memref<1x128xf32, #tpu.memory_space<vmem>>, vector<1x128xf32>
    %11 = vector.shape_cast %10 : vector<1x128xf32> to vector<1x128xf32>
    %12 = vector.broadcast %11 : vector<1x128xf32> to vector<8x128xf32>
    %cst_9 = arith.constant 0.000000e+00 : f32
    %13 = vector.broadcast %cst_9 : f32 to vector<8x32xf32>
    %14 = vector.extract_strided_slice %7 {offsets = [0, 0], sizes = [8, 128], strides = [1, 1]} : vector<64x128xf32> to vector<8x128xf32>
    %cst_10 = arith.constant dense<0.000000e+00> : vector<8x128xf32>
    %15 = tpu.matmul %13, %8, %cst_10 {dimension_numbers = #tpu.dot_dimension_numbers<[1], [0], [0], [1], [0, 0, 1, 1], [], []>} : vector<8x32xf32>, vector<32x128xf32>, vector<8x128xf32> -> vector<8x128xf32>
    %16 = arith.addf %14, %15 : vector<8x128xf32>
    %17 = arith.negf %16 : vector<8x128xf32>
    %18 = math.exp %17 : vector<8x128xf32>
    %cst_11 = arith.constant 1.000000e+00 : f32
    %19 = vector.broadcast %cst_11 : f32 to vector<8x128xf32>
    %20 = arith.addf %19, %18 : vector<8x128xf32>
    %21 = arith.divf %19, %20 : vector<8x128xf32>
    %22 = math.tanh %16 : vector<8x128xf32>
    %23 = vector.extract_strided_slice %21 {offsets = [0, 0], sizes = [8, 32], strides = [1, 1]} : vector<8x128xf32> to vector<8x32xf32>
    %24 = vector.extract_strided_slice %21 {offsets = [0, 32], sizes = [8, 32], strides = [1, 1]} : vector<8x128xf32> to vector<8x32xf32>
    %25 = vector.extract_strided_slice %22 {offsets = [0, 64], sizes = [8, 32], strides = [1, 1]} : vector<8x128xf32> to vector<8x32xf32>
    %26 = vector.extract_strided_slice %21 {offsets = [0, 96], sizes = [8, 32], strides = [1, 1]} : vector<8x128xf32> to vector<8x32xf32>
    %27 = arith.mulf %24, %13 : vector<8x32xf32>
    %28 = arith.mulf %23, %25 : vector<8x32xf32>
    %29 = arith.addf %27, %28 : vector<8x32xf32>
    %30 = math.tanh %29 : vector<8x32xf32>
    %31 = arith.mulf %26, %30 : vector<8x32xf32>
    %32 = tpu.concatenate %31, %13 in 1 : vector<8x32xf32>, vector<8x32xf32> -> vector<8x64xf32>
    %cst_12 = arith.constant dense<0.000000e+00> : vector<8x128xf32>
    %33 = tpu.matmul %32, %9, %cst_12 {dimension_numbers = #tpu.dot_dimension_numbers<[1], [0], [0], [1], [0, 0, 1, 1], [], []>} : vector<8x64xf32>, vector<64x128xf32>, vector<8x128xf32> -> vector<8x128xf32>
    %34 = arith.addf %33, %12 : vector<8x128xf32>
    %35 = arith.negf %34 : vector<8x128xf32>
    %36 = math.exp %35 : vector<8x128xf32>
    %cst_13 = arith.constant 1.000000e+00 : f32
    %37 = vector.broadcast %cst_13 : f32 to vector<8x128xf32>
    %38 = arith.addf %37, %36 : vector<8x128xf32>
    %39 = arith.divf %37, %38 : vector<8x128xf32>
    %40 = math.tanh %34 : vector<8x128xf32>
    %41 = vector.extract_strided_slice %39 {offsets = [0, 0], sizes = [8, 32], strides = [1, 1]} : vector<8x128xf32> to vector<8x32xf32>
    %42 = vector.extract_strided_slice %39 {offsets = [0, 32], sizes = [8, 32], strides = [1, 1]} : vector<8x128xf32> to vector<8x32xf32>
    %43 = vector.extract_strided_slice %40 {offsets = [0, 64], sizes = [8, 32], strides = [1, 1]} : vector<8x128xf32> to vector<8x32xf32>
    %44 = vector.extract_strided_slice %39 {offsets = [0, 96], sizes = [8, 32], strides = [1, 1]} : vector<8x128xf32> to vector<8x32xf32>
    %45 = arith.mulf %42, %13 : vector<8x32xf32>
    %46 = arith.mulf %41, %43 : vector<8x32xf32>
    %47 = arith.addf %45, %46 : vector<8x32xf32>
    %48 = math.tanh %47 : vector<8x32xf32>
    %49 = arith.mulf %44, %48 : vector<8x32xf32>
    %50 = vector.extract_strided_slice %7 {offsets = [8, 0], sizes = [8, 128], strides = [1, 1]} : vector<64x128xf32> to vector<8x128xf32>
    %cst_14 = arith.constant dense<0.000000e+00> : vector<8x128xf32>
    %51 = tpu.matmul %31, %8, %cst_14 {dimension_numbers = #tpu.dot_dimension_numbers<[1], [0], [0], [1], [0, 0, 1, 1], [], []>} : vector<8x32xf32>, vector<32x128xf32>, vector<8x128xf32> -> vector<8x128xf32>
    %52 = arith.addf %50, %51 : vector<8x128xf32>
    %53 = arith.negf %52 : vector<8x128xf32>
    %54 = math.exp %53 : vector<8x128xf32>
    %cst_15 = arith.constant 1.000000e+00 : f32
    %55 = vector.broadcast %cst_15 : f32 to vector<8x128xf32>
    %56 = arith.addf %55, %54 : vector<8x128xf32>
    %57 = arith.divf %55, %56 : vector<8x128xf32>
    %58 = math.tanh %52 : vector<8x128xf32>
    %59 = vector.extract_strided_slice %57 {offsets = [0, 0], sizes = [8, 32], strides = [1, 1]} : vector<8x128xf32> to vector<8x32xf32>
    %60 = vector.extract_strided_slice %57 {offsets = [0, 32], sizes = [8, 32], strides = [1, 1]} : vector<8x128xf32> to vector<8x32xf32>
    %61 = vector.extract_strided_slice %58 {offsets = [0, 64], sizes = [8, 32], strides = [1, 1]} : vector<8x128xf32> to vector<8x32xf32>
    %62 = vector.extract_strided_slice %57 {offsets = [0, 96], sizes = [8, 32], strides = [1, 1]} : vector<8x128xf32> to vector<8x32xf32>
    %63 = arith.mulf %60, %29 : vector<8x32xf32>
    %64 = arith.mulf %59, %61 : vector<8x32xf32>
    %65 = arith.addf %63, %64 : vector<8x32xf32>
    %66 = math.tanh %65 : vector<8x32xf32>
    %67 = arith.mulf %62, %66 : vector<8x32xf32>
    %68 = tpu.concatenate %67, %49 in 1 : vector<8x32xf32>, vector<8x32xf32> -> vector<8x64xf32>
    %cst_16 = arith.constant dense<0.000000e+00> : vector<8x128xf32>
    %69 = tpu.matmul %68, %9, %cst_16 {dimension_numbers = #tpu.dot_dimension_numbers<[1], [0], [0], [1], [0, 0, 1, 1], [], []>} : vector<8x64xf32>, vector<64x128xf32>, vector<8x128xf32> -> vector<8x128xf32>
    %70 = arith.addf %69, %12 : vector<8x128xf32>
    %71 = arith.negf %70 : vector<8x128xf32>
    %72 = math.exp %71 : vector<8x128xf32>
    %cst_17 = arith.constant 1.000000e+00 : f32
    %73 = vector.broadcast %cst_17 : f32 to vector<8x128xf32>
    %74 = arith.addf %73, %72 : vector<8x128xf32>
    %75 = arith.divf %73, %74 : vector<8x128xf32>
    %76 = math.tanh %70 : vector<8x128xf32>
    %77 = vector.extract_strided_slice %75 {offsets = [0, 0], sizes = [8, 32], strides = [1, 1]} : vector<8x128xf32> to vector<8x32xf32>
    %78 = vector.extract_strided_slice %75 {offsets = [0, 32], sizes = [8, 32], strides = [1, 1]} : vector<8x128xf32> to vector<8x32xf32>
    %79 = vector.extract_strided_slice %76 {offsets = [0, 64], sizes = [8, 32], strides = [1, 1]} : vector<8x128xf32> to vector<8x32xf32>
    %80 = vector.extract_strided_slice %75 {offsets = [0, 96], sizes = [8, 32], strides = [1, 1]} : vector<8x128xf32> to vector<8x32xf32>
    %81 = arith.mulf %78, %47 : vector<8x32xf32>
    %82 = arith.mulf %77, %79 : vector<8x32xf32>
    %83 = arith.addf %81, %82 : vector<8x32xf32>
    %84 = math.tanh %83 : vector<8x32xf32>
    %85 = arith.mulf %80, %84 : vector<8x32xf32>
    %86 = vector.extract_strided_slice %7 {offsets = [16, 0], sizes = [8, 128], strides = [1, 1]} : vector<64x128xf32> to vector<8x128xf32>
    %cst_18 = arith.constant dense<0.000000e+00> : vector<8x128xf32>
    %87 = tpu.matmul %67, %8, %cst_18 {dimension_numbers = #tpu.dot_dimension_numbers<[1], [0], [0], [1], [0, 0, 1, 1], [], []>} : vector<8x32xf32>, vector<32x128xf32>, vector<8x128xf32> -> vector<8x128xf32>
    %88 = arith.addf %86, %87 : vector<8x128xf32>
    %89 = arith.negf %88 : vector<8x128xf32>
    %90 = math.exp %89 : vector<8x128xf32>
    %cst_19 = arith.constant 1.000000e+00 : f32
    %91 = vector.broadcast %cst_19 : f32 to vector<8x128xf32>
    %92 = arith.addf %91, %90 : vector<8x128xf32>
    %93 = arith.divf %91, %92 : vector<8x128xf32>
    %94 = math.tanh %88 : vector<8x128xf32>
    %95 = vector.extract_strided_slice %93 {offsets = [0, 0], sizes = [8, 32], strides = [1, 1]} : vector<8x128xf32> to vector<8x32xf32>
    %96 = vector.extract_strided_slice %93 {offsets = [0, 32], sizes = [8, 32], strides = [1, 1]} : vector<8x128xf32> to vector<8x32xf32>
    %97 = vector.extract_strided_slice %94 {offsets = [0, 64], sizes = [8, 32], strides = [1, 1]} : vector<8x128xf32> to vector<8x32xf32>
    %98 = vector.extract_strided_slice %93 {offsets = [0, 96], sizes = [8, 32], strides = [1, 1]} : vector<8x128xf32> to vector<8x32xf32>
    %99 = arith.mulf %96, %65 : vector<8x32xf32>
    %100 = arith.mulf %95, %97 : vector<8x32xf32>
    %101 = arith.addf %99, %100 : vector<8x32xf32>
    %102 = math.tanh %101 : vector<8x32xf32>
    %103 = arith.mulf %98, %102 : vector<8x32xf32>
    %104 = tpu.concatenate %103, %85 in 1 : vector<8x32xf32>, vector<8x32xf32> -> vector<8x64xf32>
    %cst_20 = arith.constant dense<0.000000e+00> : vector<8x128xf32>
    %105 = tpu.matmul %104, %9, %cst_20 {dimension_numbers = #tpu.dot_dimension_numbers<[1], [0], [0], [1], [0, 0, 1, 1], [], []>} : vector<8x64xf32>, vector<64x128xf32>, vector<8x128xf32> -> vector<8x128xf32>
    %106 = arith.addf %105, %12 : vector<8x128xf32>
    %107 = arith.negf %106 : vector<8x128xf32>
    %108 = math.exp %107 : vector<8x128xf32>
    %cst_21 = arith.constant 1.000000e+00 : f32
    %109 = vector.broadcast %cst_21 : f32 to vector<8x128xf32>
    %110 = arith.addf %109, %108 : vector<8x128xf32>
    %111 = arith.divf %109, %110 : vector<8x128xf32>
    %112 = math.tanh %106 : vector<8x128xf32>
    %113 = vector.extract_strided_slice %111 {offsets = [0, 0], sizes = [8, 32], strides = [1, 1]} : vector<8x128xf32> to vector<8x32xf32>
    %114 = vector.extract_strided_slice %111 {offsets = [0, 32], sizes = [8, 32], strides = [1, 1]} : vector<8x128xf32> to vector<8x32xf32>
    %115 = vector.extract_strided_slice %112 {offsets = [0, 64], sizes = [8, 32], strides = [1, 1]} : vector<8x128xf32> to vector<8x32xf32>
    %116 = vector.extract_strided_slice %111 {offsets = [0, 96], sizes = [8, 32], strides = [1, 1]} : vector<8x128xf32> to vector<8x32xf32>
    %117 = arith.mulf %114, %83 : vector<8x32xf32>
    %118 = arith.mulf %113, %115 : vector<8x32xf32>
    %119 = arith.addf %117, %118 : vector<8x32xf32>
    %120 = math.tanh %119 : vector<8x32xf32>
    %121 = arith.mulf %116, %120 : vector<8x32xf32>
    %122 = vector.extract_strided_slice %7 {offsets = [24, 0], sizes = [8, 128], strides = [1, 1]} : vector<64x128xf32> to vector<8x128xf32>
    %cst_22 = arith.constant dense<0.000000e+00> : vector<8x128xf32>
    %123 = tpu.matmul %103, %8, %cst_22 {dimension_numbers = #tpu.dot_dimension_numbers<[1], [0], [0], [1], [0, 0, 1, 1], [], []>} : vector<8x32xf32>, vector<32x128xf32>, vector<8x128xf32> -> vector<8x128xf32>
    %124 = arith.addf %122, %123 : vector<8x128xf32>
    %125 = arith.negf %124 : vector<8x128xf32>
    %126 = math.exp %125 : vector<8x128xf32>
    %cst_23 = arith.constant 1.000000e+00 : f32
    %127 = vector.broadcast %cst_23 : f32 to vector<8x128xf32>
    %128 = arith.addf %127, %126 : vector<8x128xf32>
    %129 = arith.divf %127, %128 : vector<8x128xf32>
    %130 = math.tanh %124 : vector<8x128xf32>
    %131 = vector.extract_strided_slice %129 {offsets = [0, 0], sizes = [8, 32], strides = [1, 1]} : vector<8x128xf32> to vector<8x32xf32>
    %132 = vector.extract_strided_slice %129 {offsets = [0, 32], sizes = [8, 32], strides = [1, 1]} : vector<8x128xf32> to vector<8x32xf32>
    %133 = vector.extract_strided_slice %130 {offsets = [0, 64], sizes = [8, 32], strides = [1, 1]} : vector<8x128xf32> to vector<8x32xf32>
    %134 = vector.extract_strided_slice %129 {offsets = [0, 96], sizes = [8, 32], strides = [1, 1]} : vector<8x128xf32> to vector<8x32xf32>
    %135 = arith.mulf %132, %101 : vector<8x32xf32>
    %136 = arith.mulf %131, %133 : vector<8x32xf32>
    %137 = arith.addf %135, %136 : vector<8x32xf32>
    %138 = math.tanh %137 : vector<8x32xf32>
    %139 = arith.mulf %134, %138 : vector<8x32xf32>
    %140 = tpu.concatenate %139, %121 in 1 : vector<8x32xf32>, vector<8x32xf32> -> vector<8x64xf32>
    %cst_24 = arith.constant dense<0.000000e+00> : vector<8x128xf32>
    %141 = tpu.matmul %140, %9, %cst_24 {dimension_numbers = #tpu.dot_dimension_numbers<[1], [0], [0], [1], [0, 0, 1, 1], [], []>} : vector<8x64xf32>, vector<64x128xf32>, vector<8x128xf32> -> vector<8x128xf32>
    %142 = arith.addf %141, %12 : vector<8x128xf32>
    %143 = arith.negf %142 : vector<8x128xf32>
    %144 = math.exp %143 : vector<8x128xf32>
    %cst_25 = arith.constant 1.000000e+00 : f32
    %145 = vector.broadcast %cst_25 : f32 to vector<8x128xf32>
    %146 = arith.addf %145, %144 : vector<8x128xf32>
    %147 = arith.divf %145, %146 : vector<8x128xf32>
    %148 = math.tanh %142 : vector<8x128xf32>
    %149 = vector.extract_strided_slice %147 {offsets = [0, 0], sizes = [8, 32], strides = [1, 1]} : vector<8x128xf32> to vector<8x32xf32>
    %150 = vector.extract_strided_slice %147 {offsets = [0, 32], sizes = [8, 32], strides = [1, 1]} : vector<8x128xf32> to vector<8x32xf32>
    %151 = vector.extract_strided_slice %148 {offsets = [0, 64], sizes = [8, 32], strides = [1, 1]} : vector<8x128xf32> to vector<8x32xf32>
    %152 = vector.extract_strided_slice %147 {offsets = [0, 96], sizes = [8, 32], strides = [1, 1]} : vector<8x128xf32> to vector<8x32xf32>
    %153 = arith.mulf %150, %119 : vector<8x32xf32>
    %154 = arith.mulf %149, %151 : vector<8x32xf32>
    %155 = arith.addf %153, %154 : vector<8x32xf32>
    %156 = math.tanh %155 : vector<8x32xf32>
    %157 = arith.mulf %152, %156 : vector<8x32xf32>
    %158 = vector.extract_strided_slice %7 {offsets = [32, 0], sizes = [8, 128], strides = [1, 1]} : vector<64x128xf32> to vector<8x128xf32>
    %cst_26 = arith.constant dense<0.000000e+00> : vector<8x128xf32>
    %159 = tpu.matmul %139, %8, %cst_26 {dimension_numbers = #tpu.dot_dimension_numbers<[1], [0], [0], [1], [0, 0, 1, 1], [], []>} : vector<8x32xf32>, vector<32x128xf32>, vector<8x128xf32> -> vector<8x128xf32>
    %160 = arith.addf %158, %159 : vector<8x128xf32>
    %161 = arith.negf %160 : vector<8x128xf32>
    %162 = math.exp %161 : vector<8x128xf32>
    %cst_27 = arith.constant 1.000000e+00 : f32
    %163 = vector.broadcast %cst_27 : f32 to vector<8x128xf32>
    %164 = arith.addf %163, %162 : vector<8x128xf32>
    %165 = arith.divf %163, %164 : vector<8x128xf32>
    %166 = math.tanh %160 : vector<8x128xf32>
    %167 = vector.extract_strided_slice %165 {offsets = [0, 0], sizes = [8, 32], strides = [1, 1]} : vector<8x128xf32> to vector<8x32xf32>
    %168 = vector.extract_strided_slice %165 {offsets = [0, 32], sizes = [8, 32], strides = [1, 1]} : vector<8x128xf32> to vector<8x32xf32>
    %169 = vector.extract_strided_slice %166 {offsets = [0, 64], sizes = [8, 32], strides = [1, 1]} : vector<8x128xf32> to vector<8x32xf32>
    %170 = vector.extract_strided_slice %165 {offsets = [0, 96], sizes = [8, 32], strides = [1, 1]} : vector<8x128xf32> to vector<8x32xf32>
    %171 = arith.mulf %168, %137 : vector<8x32xf32>
    %172 = arith.mulf %167, %169 : vector<8x32xf32>
    %173 = arith.addf %171, %172 : vector<8x32xf32>
    %174 = math.tanh %173 : vector<8x32xf32>
    %175 = arith.mulf %170, %174 : vector<8x32xf32>
    %176 = tpu.concatenate %175, %157 in 1 : vector<8x32xf32>, vector<8x32xf32> -> vector<8x64xf32>
    %cst_28 = arith.constant dense<0.000000e+00> : vector<8x128xf32>
    %177 = tpu.matmul %176, %9, %cst_28 {dimension_numbers = #tpu.dot_dimension_numbers<[1], [0], [0], [1], [0, 0, 1, 1], [], []>} : vector<8x64xf32>, vector<64x128xf32>, vector<8x128xf32> -> vector<8x128xf32>
    %178 = arith.addf %177, %12 : vector<8x128xf32>
    %179 = arith.negf %178 : vector<8x128xf32>
    %180 = math.exp %179 : vector<8x128xf32>
    %cst_29 = arith.constant 1.000000e+00 : f32
    %181 = vector.broadcast %cst_29 : f32 to vector<8x128xf32>
    %182 = arith.addf %181, %180 : vector<8x128xf32>
    %183 = arith.divf %181, %182 : vector<8x128xf32>
    %184 = math.tanh %178 : vector<8x128xf32>
    %185 = vector.extract_strided_slice %183 {offsets = [0, 0], sizes = [8, 32], strides = [1, 1]} : vector<8x128xf32> to vector<8x32xf32>
    %186 = vector.extract_strided_slice %183 {offsets = [0, 32], sizes = [8, 32], strides = [1, 1]} : vector<8x128xf32> to vector<8x32xf32>
    %187 = vector.extract_strided_slice %184 {offsets = [0, 64], sizes = [8, 32], strides = [1, 1]} : vector<8x128xf32> to vector<8x32xf32>
    %188 = vector.extract_strided_slice %183 {offsets = [0, 96], sizes = [8, 32], strides = [1, 1]} : vector<8x128xf32> to vector<8x32xf32>
    %189 = arith.mulf %186, %155 : vector<8x32xf32>
    %190 = arith.mulf %185, %187 : vector<8x32xf32>
    %191 = arith.addf %189, %190 : vector<8x32xf32>
    %192 = math.tanh %191 : vector<8x32xf32>
    %193 = arith.mulf %188, %192 : vector<8x32xf32>
    %194 = vector.extract_strided_slice %7 {offsets = [40, 0], sizes = [8, 128], strides = [1, 1]} : vector<64x128xf32> to vector<8x128xf32>
    %cst_30 = arith.constant dense<0.000000e+00> : vector<8x128xf32>
    %195 = tpu.matmul %175, %8, %cst_30 {dimension_numbers = #tpu.dot_dimension_numbers<[1], [0], [0], [1], [0, 0, 1, 1], [], []>} : vector<8x32xf32>, vector<32x128xf32>, vector<8x128xf32> -> vector<8x128xf32>
    %196 = arith.addf %194, %195 : vector<8x128xf32>
    %197 = arith.negf %196 : vector<8x128xf32>
    %198 = math.exp %197 : vector<8x128xf32>
    %cst_31 = arith.constant 1.000000e+00 : f32
    %199 = vector.broadcast %cst_31 : f32 to vector<8x128xf32>
    %200 = arith.addf %199, %198 : vector<8x128xf32>
    %201 = arith.divf %199, %200 : vector<8x128xf32>
    %202 = math.tanh %196 : vector<8x128xf32>
    %203 = vector.extract_strided_slice %201 {offsets = [0, 0], sizes = [8, 32], strides = [1, 1]} : vector<8x128xf32> to vector<8x32xf32>
    %204 = vector.extract_strided_slice %201 {offsets = [0, 32], sizes = [8, 32], strides = [1, 1]} : vector<8x128xf32> to vector<8x32xf32>
    %205 = vector.extract_strided_slice %202 {offsets = [0, 64], sizes = [8, 32], strides = [1, 1]} : vector<8x128xf32> to vector<8x32xf32>
    %206 = vector.extract_strided_slice %201 {offsets = [0, 96], sizes = [8, 32], strides = [1, 1]} : vector<8x128xf32> to vector<8x32xf32>
    %207 = arith.mulf %204, %173 : vector<8x32xf32>
    %208 = arith.mulf %203, %205 : vector<8x32xf32>
    %209 = arith.addf %207, %208 : vector<8x32xf32>
    %210 = math.tanh %209 : vector<8x32xf32>
    %211 = arith.mulf %206, %210 : vector<8x32xf32>
    %212 = tpu.concatenate %211, %193 in 1 : vector<8x32xf32>, vector<8x32xf32> -> vector<8x64xf32>
    %cst_32 = arith.constant dense<0.000000e+00> : vector<8x128xf32>
    %213 = tpu.matmul %212, %9, %cst_32 {dimension_numbers = #tpu.dot_dimension_numbers<[1], [0], [0], [1], [0, 0, 1, 1], [], []>} : vector<8x64xf32>, vector<64x128xf32>, vector<8x128xf32> -> vector<8x128xf32>
    %214 = arith.addf %213, %12 : vector<8x128xf32>
    %215 = arith.negf %214 : vector<8x128xf32>
    %216 = math.exp %215 : vector<8x128xf32>
    %cst_33 = arith.constant 1.000000e+00 : f32
    %217 = vector.broadcast %cst_33 : f32 to vector<8x128xf32>
    %218 = arith.addf %217, %216 : vector<8x128xf32>
    %219 = arith.divf %217, %218 : vector<8x128xf32>
    %220 = math.tanh %214 : vector<8x128xf32>
    %221 = vector.extract_strided_slice %219 {offsets = [0, 0], sizes = [8, 32], strides = [1, 1]} : vector<8x128xf32> to vector<8x32xf32>
    %222 = vector.extract_strided_slice %219 {offsets = [0, 32], sizes = [8, 32], strides = [1, 1]} : vector<8x128xf32> to vector<8x32xf32>
    %223 = vector.extract_strided_slice %220 {offsets = [0, 64], sizes = [8, 32], strides = [1, 1]} : vector<8x128xf32> to vector<8x32xf32>
    %224 = vector.extract_strided_slice %219 {offsets = [0, 96], sizes = [8, 32], strides = [1, 1]} : vector<8x128xf32> to vector<8x32xf32>
    %225 = arith.mulf %222, %191 : vector<8x32xf32>
    %226 = arith.mulf %221, %223 : vector<8x32xf32>
    %227 = arith.addf %225, %226 : vector<8x32xf32>
    %228 = math.tanh %227 : vector<8x32xf32>
    %229 = arith.mulf %224, %228 : vector<8x32xf32>
    %230 = vector.extract_strided_slice %7 {offsets = [48, 0], sizes = [8, 128], strides = [1, 1]} : vector<64x128xf32> to vector<8x128xf32>
    %cst_34 = arith.constant dense<0.000000e+00> : vector<8x128xf32>
    %231 = tpu.matmul %211, %8, %cst_34 {dimension_numbers = #tpu.dot_dimension_numbers<[1], [0], [0], [1], [0, 0, 1, 1], [], []>} : vector<8x32xf32>, vector<32x128xf32>, vector<8x128xf32> -> vector<8x128xf32>
    %232 = arith.addf %230, %231 : vector<8x128xf32>
    %233 = arith.negf %232 : vector<8x128xf32>
    %234 = math.exp %233 : vector<8x128xf32>
    %cst_35 = arith.constant 1.000000e+00 : f32
    %235 = vector.broadcast %cst_35 : f32 to vector<8x128xf32>
    %236 = arith.addf %235, %234 : vector<8x128xf32>
    %237 = arith.divf %235, %236 : vector<8x128xf32>
    %238 = math.tanh %232 : vector<8x128xf32>
    %239 = vector.extract_strided_slice %237 {offsets = [0, 0], sizes = [8, 32], strides = [1, 1]} : vector<8x128xf32> to vector<8x32xf32>
    %240 = vector.extract_strided_slice %237 {offsets = [0, 32], sizes = [8, 32], strides = [1, 1]} : vector<8x128xf32> to vector<8x32xf32>
    %241 = vector.extract_strided_slice %238 {offsets = [0, 64], sizes = [8, 32], strides = [1, 1]} : vector<8x128xf32> to vector<8x32xf32>
    %242 = vector.extract_strided_slice %237 {offsets = [0, 96], sizes = [8, 32], strides = [1, 1]} : vector<8x128xf32> to vector<8x32xf32>
    %243 = arith.mulf %240, %209 : vector<8x32xf32>
    %244 = arith.mulf %239, %241 : vector<8x32xf32>
    %245 = arith.addf %243, %244 : vector<8x32xf32>
    %246 = math.tanh %245 : vector<8x32xf32>
    %247 = arith.mulf %242, %246 : vector<8x32xf32>
    %248 = tpu.concatenate %247, %229 in 1 : vector<8x32xf32>, vector<8x32xf32> -> vector<8x64xf32>
    %cst_36 = arith.constant dense<0.000000e+00> : vector<8x128xf32>
    %249 = tpu.matmul %248, %9, %cst_36 {dimension_numbers = #tpu.dot_dimension_numbers<[1], [0], [0], [1], [0, 0, 1, 1], [], []>} : vector<8x64xf32>, vector<64x128xf32>, vector<8x128xf32> -> vector<8x128xf32>
    %250 = arith.addf %249, %12 : vector<8x128xf32>
    %251 = arith.negf %250 : vector<8x128xf32>
    %252 = math.exp %251 : vector<8x128xf32>
    %cst_37 = arith.constant 1.000000e+00 : f32
    %253 = vector.broadcast %cst_37 : f32 to vector<8x128xf32>
    %254 = arith.addf %253, %252 : vector<8x128xf32>
    %255 = arith.divf %253, %254 : vector<8x128xf32>
    %256 = math.tanh %250 : vector<8x128xf32>
    %257 = vector.extract_strided_slice %255 {offsets = [0, 0], sizes = [8, 32], strides = [1, 1]} : vector<8x128xf32> to vector<8x32xf32>
    %258 = vector.extract_strided_slice %255 {offsets = [0, 32], sizes = [8, 32], strides = [1, 1]} : vector<8x128xf32> to vector<8x32xf32>
    %259 = vector.extract_strided_slice %256 {offsets = [0, 64], sizes = [8, 32], strides = [1, 1]} : vector<8x128xf32> to vector<8x32xf32>
    %260 = vector.extract_strided_slice %255 {offsets = [0, 96], sizes = [8, 32], strides = [1, 1]} : vector<8x128xf32> to vector<8x32xf32>
    %261 = arith.mulf %258, %227 : vector<8x32xf32>
    %262 = arith.mulf %257, %259 : vector<8x32xf32>
    %263 = arith.addf %261, %262 : vector<8x32xf32>
    %264 = math.tanh %263 : vector<8x32xf32>
    %265 = arith.mulf %260, %264 : vector<8x32xf32>
    %266 = vector.extract_strided_slice %7 {offsets = [56, 0], sizes = [8, 128], strides = [1, 1]} : vector<64x128xf32> to vector<8x128xf32>
    %cst_38 = arith.constant dense<0.000000e+00> : vector<8x128xf32>
    %267 = tpu.matmul %247, %8, %cst_38 {dimension_numbers = #tpu.dot_dimension_numbers<[1], [0], [0], [1], [0, 0, 1, 1], [], []>} : vector<8x32xf32>, vector<32x128xf32>, vector<8x128xf32> -> vector<8x128xf32>
    %268 = arith.addf %266, %267 : vector<8x128xf32>
    %269 = arith.negf %268 : vector<8x128xf32>
    %270 = math.exp %269 : vector<8x128xf32>
    %cst_39 = arith.constant 1.000000e+00 : f32
    %271 = vector.broadcast %cst_39 : f32 to vector<8x128xf32>
    %272 = arith.addf %271, %270 : vector<8x128xf32>
    %273 = arith.divf %271, %272 : vector<8x128xf32>
    %274 = math.tanh %268 : vector<8x128xf32>
    %275 = vector.extract_strided_slice %273 {offsets = [0, 0], sizes = [8, 32], strides = [1, 1]} : vector<8x128xf32> to vector<8x32xf32>
    %276 = vector.extract_strided_slice %273 {offsets = [0, 32], sizes = [8, 32], strides = [1, 1]} : vector<8x128xf32> to vector<8x32xf32>
    %277 = vector.extract_strided_slice %274 {offsets = [0, 64], sizes = [8, 32], strides = [1, 1]} : vector<8x128xf32> to vector<8x32xf32>
    %278 = vector.extract_strided_slice %273 {offsets = [0, 96], sizes = [8, 32], strides = [1, 1]} : vector<8x128xf32> to vector<8x32xf32>
    %279 = arith.mulf %276, %245 : vector<8x32xf32>
    %280 = arith.mulf %275, %277 : vector<8x32xf32>
    %281 = arith.addf %279, %280 : vector<8x32xf32>
    %282 = math.tanh %281 : vector<8x32xf32>
    %283 = arith.mulf %278, %282 : vector<8x32xf32>
    %284 = tpu.concatenate %283, %265 in 1 : vector<8x32xf32>, vector<8x32xf32> -> vector<8x64xf32>
    %cst_40 = arith.constant dense<0.000000e+00> : vector<8x128xf32>
    %285 = tpu.matmul %284, %9, %cst_40 {dimension_numbers = #tpu.dot_dimension_numbers<[1], [0], [0], [1], [0, 0, 1, 1], [], []>} : vector<8x64xf32>, vector<64x128xf32>, vector<8x128xf32> -> vector<8x128xf32>
    %286 = arith.addf %285, %12 : vector<8x128xf32>
    %287 = arith.negf %286 : vector<8x128xf32>
    %288 = math.exp %287 : vector<8x128xf32>
    %cst_41 = arith.constant 1.000000e+00 : f32
    %289 = vector.broadcast %cst_41 : f32 to vector<8x128xf32>
    %290 = arith.addf %289, %288 : vector<8x128xf32>
    %291 = arith.divf %289, %290 : vector<8x128xf32>
    %292 = math.tanh %286 : vector<8x128xf32>
    %293 = vector.extract_strided_slice %291 {offsets = [0, 0], sizes = [8, 32], strides = [1, 1]} : vector<8x128xf32> to vector<8x32xf32>
    %294 = vector.extract_strided_slice %291 {offsets = [0, 32], sizes = [8, 32], strides = [1, 1]} : vector<8x128xf32> to vector<8x32xf32>
    %295 = vector.extract_strided_slice %292 {offsets = [0, 64], sizes = [8, 32], strides = [1, 1]} : vector<8x128xf32> to vector<8x32xf32>
    %296 = arith.mulf %294, %263 : vector<8x32xf32>
    %297 = arith.mulf %293, %295 : vector<8x32xf32>
    %298 = arith.addf %296, %297 : vector<8x32xf32>
    %299 = tpu.concatenate %281, %298 in 1 : vector<8x32xf32>, vector<8x32xf32> -> vector<8x64xf32>
    %c0_42 = arith.constant 0 : index
    %c0_43 = arith.constant 0 : index
    %300 = vector.load %arg5[%c0_42, %c0_43] : memref<8x64xf32, #tpu.memory_space<vmem>>, vector<8x64xf32>
    tpu.vector_store %arg5[%c0_42, %c0_43], %299 {strides = array<i32>} : memref<8x64xf32, #tpu.memory_space<vmem>>, vector<8x64xf32>,
    return
  }
}

</mosaic_0001>

<llo_original>
// kernel: _forward_impl.1
$region0: #{_forward_impl.1}
  #allocation0 [shape = 'u32[]', space=smem, size = 0x4, offset = 0x4, fixed_abs, tag = 'smem constant byte address 0x4 - core index']
  #allocation1 [shape = 'u32[144,128]{1,0:T(1,128)}', space=vmem, size = 0x12000, scoped, tag = 'internal scratch']
  %s0 = inlined_call_operand.vmem [shape: s32[64,1], index: 0, kind: input, shape index: {}]
  %s1 = inlined_call_operand.hbm [shape: f32[384,128], index: 1, kind: input, shape index: {}]
  %s2 = inlined_call_operand.vmem [shape: f32[32,128], index: 2, kind: input, shape index: {}]
  %s3 = inlined_call_operand.vmem [shape: f32[64,128], index: 3, kind: input, shape index: {}]
  %s4 = inlined_call_operand.vmem [shape: f32[1,128], index: 4, kind: input, shape index: {}]
  %s5 = inlined_call_operand.vmem [shape: f32[8,64], index: 5, kind: output, shape index: {}]
  %s6 = sld [smem:[#allocation0]]
  $region34: #{_forward_impl.1} parent=0
    _
  %s8 = ssub.s32 1, %s6
  %s9 = scalar_select 0, %s8, %s6
  $region1: #{_forward_impl.1} parent=0
    #allocation2 [shape = 'u8[196608]{0}', space=vmem, size = 0x30000, scoped, tag = 'input window, operand 1, single buffered']
    #allocation3 [shape = 's32[1]{0}', space=sflag, size = 0x4, scoped, tag = 'scoped memory for _forward_impl.1']
    %10 = vsyncpa [#allocation3], 0
    // Predicated region
    $region2: #{_forward_impl.1} parent=1 // pred_check
      _
    $region3: #{_forward_impl.1} parent=1 // pred_check_branch
      %12 = sbr.rel (0) target = $region5
    $region4: #{_forward_impl.1} parent=1 // pred_region
      _
    $region5: #{_forward_impl.1} parent=1 // pred_fallthru
      _
    // Predicated region
    $region6: #{_forward_impl.1} parent=1 // pred_check
      _
    $region7: #{_forward_impl.1} parent=1 // pred_check_branch
      %14 = sbr.rel (0) target = $region9
    $region8: #{_forward_impl.1} parent=1 // pred_region
      %s16 = ssub.s32 6144, 6144
      %17 = vsyncadd [#allocation3], %s16
      %s18 = sshll.u32 [#allocation2], 4
      %s19 = int_to_ptr.vmem [resolvable:$true] %s18
      %24 = dma.hbm_to_vmem [thread:$0]  %s1, 6144, %s19, [#allocation3], 128, 128, 8
    $region9: #{_forward_impl.1} parent=1 // pred_fallthru
      _
    // Predicated region
    $region10: #{_forward_impl.1} parent=1 // pred_check
      _
    $region11: #{_forward_impl.1} parent=1 // pred_check_branch
      %26 = sbr.rel (0) target = $region13
    $region12: #{_forward_impl.1} parent=1 // pred_region
      _
    $region13: #{_forward_impl.1} parent=1 // pred_fallthru
      _
    // Predicated region
    $region14: #{_forward_impl.1} parent=1 // pred_check
      _
    $region15: #{_forward_impl.1} parent=1 // pred_check_branch
      %28 = sbr.rel (0) target = $region17
    $region16: #{_forward_impl.1} parent=1 // pred_region
      _
    $region17: #{_forward_impl.1} parent=1 // pred_fallthru
      _
    // Predicated region
    $region18: #{_forward_impl.1} parent=1 // pred_check
      _
    $region19: #{_forward_impl.1} parent=1 // pred_check_branch
      %30 = sbr.rel (0) target = $region21
    $region20: #{_forward_impl.1} parent=1 // pred_region
      _
    $region21: #{_forward_impl.1} parent=1 // pred_fallthru
      _
    // Predicated region
    $region22: #{_forward_impl.1} parent=1 // pred_check
      _
    $region23: #{_forward_impl.1} parent=1 // pred_check_branch
      %32 = sbr.rel (0) target = $region25
    $region24: #{_forward_impl.1} parent=1 // pred_region
      %33 = dma.done [#allocation3], 6144
    $region25: #{_forward_impl.1} parent=1 // pred_fallthru
      _
    %v34 = vld [vmem:[%s0] sm:$0xff]
    %v35 = vld [vmem:[%s0 + $0x8] sm:$0xff]
    %v36 = vld [vmem:[%s0 + $0x10] sm:$0xff]
    %v37 = vld [vmem:[%s0 + $0x18] sm:$0xff]
    %v38 = vld [vmem:[%s0 + $0x20] sm:$0xff]
    %v39 = vld [vmem:[%s0 + $0x28] sm:$0xff]
    %v40 = vld [vmem:[%s0 + $0x30] sm:$0xff]
    %v41 = vld [vmem:[%s0 + $0x38] sm:$0xff]
    %v42 = vlaneseq
    %v43 = vand.u32 %v42, 127
    %v44 = vadd.s32 %v43, 128
    %v45 = vadd.s32 %v43, 256
    %46 = vset.pattern.permute.xlu0 0
    %47 = vperm.xlu0 %46, %v34
    %v48 = vpop.permute.xlu0 %47
    %49 = vset.pattern.permute.xlu0 0
    %50 = vperm.xlu0 %49, %v35
    %v51 = vpop.permute.xlu0 %50
    %52 = vset.pattern.permute.xlu0 0
    %53 = vperm.xlu0 %52, %v36
    %v54 = vpop.permute.xlu0 %53
    %55 = vset.pattern.permute.xlu0 0
    %56 = vperm.xlu0 %55, %v37
    %v57 = vpop.permute.xlu0 %56
    %58 = vset.pattern.permute.xlu0 0
    %59 = vperm.xlu0 %58, %v38
    %v60 = vpop.permute.xlu0 %59
    %61 = vset.pattern.permute.xlu0 0
    %62 = vperm.xlu0 %61, %v39
    %v63 = vpop.permute.xlu0 %62
    %64 = vset.pattern.permute.xlu0 0
    %65 = vperm.xlu0 %64, %v40
    %v66 = vpop.permute.xlu0 %65
    %67 = vset.pattern.permute.xlu0 0
    %68 = vperm.xlu0 %67, %v41
    %v69 = vpop.permute.xlu0 %68
    %vm70 = vcmp.eq.s32.totalorder %v43, %v48
    %vm71 = vcmp.eq.s32.totalorder %v44, %v48
    %vm72 = vcmp.eq.s32.totalorder %v45, %v48
    %vm73 = vcmp.eq.s32.totalorder %v43, %v51
    %vm74 = vcmp.eq.s32.totalorder %v44, %v51
    %vm75 = vcmp.eq.s32.totalorder %v45, %v51
    %vm76 = vcmp.eq.s32.totalorder %v43, %v54
    %vm77 = vcmp.eq.s32.totalorder %v44, %v54
    %vm78 = vcmp.eq.s32.totalorder %v45, %v54
    %vm79 = vcmp.eq.s32.totalorder %v43, %v57
    %vm80 = vcmp.eq.s32.totalorder %v44, %v57
    %vm81 = vcmp.eq.s32.totalorder %v45, %v57
    %vm82 = vcmp.eq.s32.totalorder %v43, %v60
    %vm83 = vcmp.eq.s32.totalorder %v44, %v60
    %vm84 = vcmp.eq.s32.totalorder %v45, %v60
    %vm85 = vcmp.eq.s32.totalorder %v43, %v63
    %vm86 = vcmp.eq.s32.totalorder %v44, %v63
    %vm87 = vcmp.eq.s32.totalorder %v45, %v63
    %vm88 = vcmp.eq.s32.totalorder %v43, %v66
    %vm89 = vcmp.eq.s32.totalorder %v44, %v66
    %vm90 = vcmp.eq.s32.totalorder %v45, %v66
    %vm91 = vcmp.eq.s32.totalorder %v43, %v69
    %vm92 = vcmp.eq.s32.totalorder %v44, %v69
    %vm93 = vcmp.eq.s32.totalorder %v45, %v69
    %v94 = vsel %vm70, 1, 0
    %v95 = vsel %vm71, 1, 0
    %v96 = vsel %vm72, 1, 0
    %v97 = vsel %vm73, 1, 0
    %v98 = vsel %vm74, 1, 0
    %v99 = vsel %vm75, 1, 0
    %v100 = vsel %vm76, 1, 0
    %v101 = vsel %vm77, 1, 0
    %v102 = vsel %vm78, 1, 0
    %v103 = vsel %vm79, 1, 0
    %v104 = vsel %vm80, 1, 0
    %v105 = vsel %vm81, 1, 0
    %v106 = vsel %vm82, 1, 0
    %v107 = vsel %vm83, 1, 0
    %v108 = vsel %vm84, 1, 0
    %v109 = vsel %vm85, 1, 0
    %v110 = vsel %vm86, 1, 0
    %v111 = vsel %vm87, 1, 0
    %v112 = vsel %vm88, 1, 0
    %v113 = vsel %vm89, 1, 0
    %v114 = vsel %vm90, 1, 0
    %v115 = vsel %vm91, 1, 0
    %v116 = vsel %vm92, 1, 0
    %v117 = vsel %vm93, 1, 0
    %v118 = vcvt.s32.f32 %v94
    %v119 = vcvt.s32.f32 %v95
    %v120 = vcvt.s32.f32 %v96
    %v121 = vcvt.s32.f32 %v97
    %v122 = vcvt.s32.f32 %v98
    %v123 = vcvt.s32.f32 %v99
    %v124 = vcvt.s32.f32 %v100
    %v125 = vcvt.s32.f32 %v101
    %v126 = vcvt.s32.f32 %v102
    %v127 = vcvt.s32.f32 %v103
    %v128 = vcvt.s32.f32 %v104
    %v129 = vcvt.s32.f32 %v105
    %v130 = vcvt.s32.f32 %v106
    %v131 = vcvt.s32.f32 %v107
    %v132 = vcvt.s32.f32 %v108
    %v133 = vcvt.s32.f32 %v109
    %v134 = vcvt.s32.f32 %v110
    %v135 = vcvt.s32.f32 %v111
    %v136 = vcvt.s32.f32 %v112
    %v137 = vcvt.s32.f32 %v113
    %v138 = vcvt.s32.f32 %v114
    %v139 = vcvt.s32.f32 %v115
    %v140 = vcvt.s32.f32 %v116
    %v141 = vcvt.s32.f32 %v117
    %v142 = vld [vmem:[#allocation2] sm:$0xff]
    %v143 = vld [vmem:[#allocation2 + $0x8] sm:$0xff]
    %v144 = vld [vmem:[#allocation2 + $0x10] sm:$0xff]
    %v145 = vld [vmem:[#allocation2 + $0x18] sm:$0xff]
    %v146 = vld [vmem:[#allocation2 + $0x20] sm:$0xff]
    %v147 = vld [vmem:[#allocation2 + $0x28] sm:$0xff]
    %v148 = vld [vmem:[#allocation2 + $0x30] sm:$0xff]
    %v149 = vld [vmem:[#allocation2 + $0x38] sm:$0xff]
    %v150 = vld [vmem:[#allocation2 + $0x40] sm:$0xff]
    %v151 = vld [vmem:[#allocation2 + $0x48] sm:$0xff]
    %v152 = vld [vmem:[#allocation2 + $0x50] sm:$0xff]
    %v153 = vld [vmem:[#allocation2 + $0x58] sm:$0xff]
    %v154 = vld [vmem:[#allocation2 + $0x60] sm:$0xff]
    %v155 = vld [vmem:[#allocation2 + $0x68] sm:$0xff]
    %v156 = vld [vmem:[#allocation2 + $0x70] sm:$0xff]
    %v157 = vld [vmem:[#allocation2 + $0x78] sm:$0xff]
    %v158 = vld [vmem:[#allocation2 + $0x80] sm:$0xff]
    %v159 = vld [vmem:[#allocation2 + $0x88] sm:$0xff]
    %v160 = vld [vmem:[#allocation2 + $0x90] sm:$0xff]
    %v161 = vld [vmem:[#allocation2 + $0x98] sm:$0xff]
    %v162 = vld [vmem:[#allocation2 + $0xa0] sm:$0xff]
    %v163 = vld [vmem:[#allocation2 + $0xa8] sm:$0xff]
    %v164 = vld [vmem:[#allocation2 + $0xb0] sm:$0xff]
    %v165 = vld [vmem:[#allocation2 + $0xb8] sm:$0xff]
    %v166 = vld [vmem:[#allocation2 + $0xc0] sm:$0xff]
    %v167 = vld [vmem:[#allocation2 + $0xc8] sm:$0xff]
    %v168 = vld [vmem:[#allocation2 + $0xd0] sm:$0xff]
    %v169 = vld [vmem:[#allocation2 + $0xd8] sm:$0xff]
    %v170 = vld [vmem:[#allocation2 + $0xe0] sm:$0xff]
    %v171 = vld [vmem:[#allocation2 + $0xe8] sm:$0xff]
    %v172 = vld [vmem:[#allocation2 + $0xf0] sm:$0xff]
    %v173 = vld [vmem:[#allocation2 + $0xf8] sm:$0xff]
    %v174 = vld [vmem:[#allocation2 + $0x100] sm:$0xff]
    %v175 = vld [vmem:[#allocation2 + $0x108] sm:$0xff]
    %v176 = vld [vmem:[#allocation2 + $0x110] sm:$0xff]
    %v177 = vld [vmem:[#allocation2 + $0x118] sm:$0xff]
    %v178 = vld [vmem:[#allocation2 + $0x120] sm:$0xff]
    %v179 = vld [vmem:[#allocation2 + $0x128] sm:$0xff]
    %v180 = vld [vmem:[#allocation2 + $0x130] sm:$0xff]
    %v181 = vld [vmem:[#allocation2 + $0x138] sm:$0xff]
    %v182 = vld [vmem:[#allocation2 + $0x140] sm:$0xff]
    %v183 = vld [vmem:[#allocation2 + $0x148] sm:$0xff]
    %v184 = vld [vmem:[#allocation2 + $0x150] sm:$0xff]
    %v185 = vld [vmem:[#allocation2 + $0x158] sm:$0xff]
    %v186 = vld [vmem:[#allocation2 + $0x160] sm:$0xff]
    %v187 = vld [vmem:[#allocation2 + $0x168] sm:$0xff]
    %v188 = vld [vmem:[#allocation2 + $0x170] sm:$0xff]
    %v189 = vld [vmem:[#allocation2 + $0x178] sm:$0xff]
    %190 = vmatprep.subr.mxu0 0.0
    %191 = vmatpush1.msra.mxu0 %v157
    %192 = vmatprep.subr.mxu0 0.0
    %193 = vmatpush1.msra.mxu0 %v156
    %194 = vmatprep.subr.mxu0 0.0
    %195 = vmatpush1.msra.mxu0 %v155
    %196 = vmatprep.subr.mxu0 0.0
    %197 = vmatpush1.msra.mxu0 %v154
    %198 = vmatprep.subr.mxu0 0.0
    %199 = vmatpush1.msra.mxu0 %v153
    %200 = vmatprep.subr.mxu0 0.0
    %201 = vmatpush1.msra.mxu0 %v152
    %202 = vmatprep.subr.mxu0 0.0
    %203 = vmatpush1.msra.mxu0 %v151
    %204 = vmatprep.subr.mxu0 0.0
    %205 = vmatpush1.msra.mxu0 %v150
    %206 = vmatprep.subr.mxu0 0.0
    %207 = vmatpush1.msra.mxu0 %v149
    %208 = vmatprep.subr.mxu0 0.0
    %209 = vmatpush1.msra.mxu0 %v148
    %210 = vmatprep.subr.mxu0 0.0
    %211 = vmatpush1.msra.mxu0 %v147
    %212 = vmatprep.subr.mxu0 0.0
    %213 = vmatpush1.msra.mxu0 %v146
    %214 = vmatprep.subr.mxu0 0.0
    %215 = vmatpush1.msra.mxu0 %v145
    %216 = vmatprep.subr.mxu0 0.0
    %217 = vmatpush1.msra.mxu0 %v144
    %218 = vmatprep.subr.mxu0 0.0
    %219 = vmatpush1.msra.mxu0 %v143
    %220 = vmatprep.subr.mxu0 0.0
    %221 = vmatpush1.msra.mxu0 %v142
    %222 = vmatprep.subr.mxu0 0.0
    %223 = vmatpush2.msra.mxu0 %v173
    %224 = vmatprep.subr.mxu0 0.0
    %225 = vmatpush2.msra.mxu0 %v172
    %226 = vmatprep.subr.mxu0 0.0
    %227 = vmatpush2.msra.mxu0 %v171
    %228 = vmatprep.subr.mxu0 0.0
    %229 = vmatpush2.msra.mxu0 %v170
    %230 = vmatprep.subr.mxu0 0.0
    %231 = vmatpush2.msra.mxu0 %v169
    %232 = vmatprep.subr.mxu0 0.0
    %233 = vmatpush2.msra.mxu0 %v168
    %234 = vmatprep.subr.mxu0 0.0
    %235 = vmatpush2.msra.mxu0 %v167
    %236 = vmatprep.subr.mxu0 0.0
    %237 = vmatpush2.msra.mxu0 %v166
    %238 = vmatprep.subr.mxu0 0.0
    %239 = vmatpush2.msra.mxu0 %v165
    %240 = vmatprep.subr.mxu0 0.0
    %241 = vmatpush2.msra.mxu0 %v164
    %242 = vmatprep.subr.mxu0 0.0
    %243 = vmatpush2.msra.mxu0 %v163
    %244 = vmatprep.subr.mxu0 0.0
    %245 = vmatpush2.msra.mxu0 %v162
    %246 = vmatprep.subr.mxu0 0.0
    %247 = vmatpush2.msra.mxu0 %v161
    %248 = vmatprep.subr.mxu0 0.0
    %249 = vmatpush2.msra.mxu0 %v160
    %250 = vmatprep.subr.mxu0 0.0
    %251 = vmatpush2.msra.mxu0 %v159
    %252 = vmatprep.subr.mxu0 0.0
    %253 = vmatpush2.msra.mxu0 %v158
    %254 = vmatprep.mubr.f32.mxu0 %v119
    %255 = vmatmul.mubr.f32.gmra.mxu0 %v118
    %v256 = vpop.f32.mrf.mxu0
    %v257 = vadd.f32 0.0, %v256
    %v258 = vpop.f32.mrf.mxu0
    %259 = vmatprep.mubr.f32.mxu0 %v122
    %260 = vmatmul.mubr.f32.gmra.mxu0 %v121
    %v261 = vpop.f32.mrf.mxu0
    %v262 = vadd.f32 0.0, %v261
    %v263 = vpop.f32.mrf.mxu0
    %264 = vmatprep.mubr.f32.mxu0 %v125
    %265 = vmatmul.mubr.f32.gmra.mxu0 %v124
    %v266 = vpop.f32.mrf.mxu0
    %v267 = vadd.f32 0.0, %v266
    %v268 = vpop.f32.mrf.mxu0
    %269 = vmatprep.mubr.f32.mxu0 %v128
    %270 = vmatmul.mubr.f32.gmra.mxu0 %v127
    %v271 = vpop.f32.mrf.mxu0
    %v272 = vadd.f32 0.0, %v271
    %v273 = vpop.f32.mrf.mxu0
    %274 = vmatprep.mubr.f32.mxu0 %v131
    %275 = vmatmul.mubr.f32.gmra.mxu0 %v130
    %v276 = vpop.f32.mrf.mxu0
    %v277 = vadd.f32 0.0, %v276
    %v278 = vpop.f32.mrf.mxu0
    %279 = vmatprep.mubr.f32.mxu0 %v134
    %280 = vmatmul.mubr.f32.gmra.mxu0 %v133
    %v281 = vpop.f32.mrf.mxu0
    %v282 = vadd.f32 0.0, %v281
    %v283 = vpop.f32.mrf.mxu0
    %284 = vmatprep.mubr.f32.mxu0 %v137
    %285 = vmatmul.mubr.f32.gmra.mxu0 %v136
    %v286 = vpop.f32.mrf.mxu0
    %v287 = vadd.f32 0.0, %v286
    %v288 = vpop.f32.mrf.mxu0
    %289 = vmatprep.mubr.f32.mxu0 %v140
    %290 = vmatmul.mubr.f32.gmra.mxu0 %v139
    %v291 = vpop.f32.mrf.mxu0
    %v292 = vadd.f32 0.0, %v291
    %v293 = vpop.f32.mrf.mxu0
    %294 = vdwg.mxu0
    %295 = vmatprep.subr.mxu0 0.0
    %296 = vmatpush1.msra.mxu0 %v189
    %297 = vmatprep.subr.mxu0 0.0
    %298 = vmatpush1.msra.mxu0 %v188
    %299 = vmatprep.subr.mxu0 0.0
    %300 = vmatpush1.msra.mxu0 %v187
    %301 = vmatprep.subr.mxu0 0.0
    %302 = vmatpush1.msra.mxu0 %v186
    %303 = vmatprep.subr.mxu0 0.0
    %304 = vmatpush1.msra.mxu0 %v185
    %305 = vmatprep.subr.mxu0 0.0
    %306 = vmatpush1.msra.mxu0 %v184
    %307 = vmatprep.subr.mxu0 0.0
    %308 = vmatpush1.msra.mxu0 %v183
    %309 = vmatprep.subr.mxu0 0.0
    %310 = vmatpush1.msra.mxu0 %v182
    %311 = vmatprep.subr.mxu0 0.0
    %312 = vmatpush1.msra.mxu0 %v181
    %313 = vmatprep.subr.mxu0 0.0
    %314 = vmatpush1.msra.mxu0 %v180
    %315 = vmatprep.subr.mxu0 0.0
    %316 = vmatpush1.msra.mxu0 %v179
    %317 = vmatprep.subr.mxu0 0.0
    %318 = vmatpush1.msra.mxu0 %v178
    %319 = vmatprep.subr.mxu0 0.0
    %320 = vmatpush1.msra.mxu0 %v177
    %321 = vmatprep.subr.mxu0 0.0
    %322 = vmatpush1.msra.mxu0 %v176
    %323 = vmatprep.subr.mxu0 0.0
    %324 = vmatpush1.msra.mxu0 %v175
    %325 = vmatprep.subr.mxu0 0.0
    %326 = vmatpush1.msra.mxu0 %v174
    %327 = vmatprep.subr.mxu0 0.0
    %328 = vmatpush2.msra.mxu0 0.0
    %329 = vmatprep.subr.mxu0 0.0
    %330 = vmatpush2.msra.mxu0 0.0
    %331 = vmatprep.subr.mxu0 0.0
    %332 = vmatpush2.msra.mxu0 0.0
    %333 = vmatprep.subr.mxu0 0.0
    %334 = vmatpush2.msra.mxu0 0.0
    %335 = vmatprep.subr.mxu0 0.0
    %336 = vmatpush2.msra.mxu0 0.0
    %337 = vmatprep.subr.mxu0 0.0
    %338 = vmatpush2.msra.mxu0 0.0
    %339 = vmatprep.subr.mxu0 0.0
    %340 = vmatpush2.msra.mxu0 0.0
    %341 = vmatprep.subr.mxu0 0.0
    %342 = vmatpush2.msra.mxu0 0.0
    %343 = vmatprep.subr.mxu0 0.0
    %344 = vmatpush2.msra.mxu0 0.0
    %345 = vmatprep.subr.mxu0 0.0
    %346 = vmatpush2.msra.mxu0 0.0
    %347 = vmatprep.subr.mxu0 0.0
    %348 = vmatpush2.msra.mxu0 0.0
    %349 = vmatprep.subr.mxu0 0.0
    %350 = vmatpush2.msra.mxu0 0.0
    %351 = vmatprep.subr.mxu0 0.0
    %352 = vmatpush2.msra.mxu0 0.0
    %353 = vmatprep.subr.mxu0 0.0
    %354 = vmatpush2.msra.mxu0 0.0
    %355 = vmatprep.subr.mxu0 0.0
    %356 = vmatpush2.msra.mxu0 0.0
    %357 = vmatprep.subr.mxu0 0.0
    %358 = vmatpush2.msra.mxu0 0.0
    %359 = vmatprep.mubr.f32.mxu0 0.0
    %360 = vmatmul.mubr.f32.gmra.mxu0 %v120
    %v361 = vpop.f32.mrf.mxu0
    %v362 = vadd.f32 %v257, %v361
    %v363 = vpop.f32.mrf.mxu0
    %364 = vmatprep.mubr.f32.mxu0 0.0
    %365 = vmatmul.mubr.f32.gmra.mxu0 %v123
    %v366 = vpop.f32.mrf.mxu0
    %v367 = vadd.f32 %v262, %v366
    %v368 = vpop.f32.mrf.mxu0
    %369 = vmatprep.mubr.f32.mxu0 0.0
    %370 = vmatmul.mubr.f32.gmra.mxu0 %v126
    %v371 = vpop.f32.mrf.mxu0
    %v372 = vadd.f32 %v267, %v371
    %v373 = vpop.f32.mrf.mxu0
    %374 = vmatprep.mubr.f32.mxu0 0.0
    %375 = vmatmul.mubr.f32.gmra.mxu0 %v129
    %v376 = vpop.f32.mrf.mxu0
    %v377 = vadd.f32 %v272, %v376
    %v378 = vpop.f32.mrf.mxu0
    %379 = vmatprep.mubr.f32.mxu0 0.0
    %380 = vmatmul.mubr.f32.gmra.mxu0 %v132
    %v381 = vpop.f32.mrf.mxu0
    %v382 = vadd.f32 %v277, %v381
    %v383 = vpop.f32.mrf.mxu0
    %384 = vmatprep.mubr.f32.mxu0 0.0
    %385 = vmatmul.mubr.f32.gmra.mxu0 %v135
    %v386 = vpop.f32.mrf.mxu0
    %v387 = vadd.f32 %v282, %v386
    %v388 = vpop.f32.mrf.mxu0
    %389 = vmatprep.mubr.f32.mxu0 0.0
    %390 = vmatmul.mubr.f32.gmra.mxu0 %v138
    %v391 = vpop.f32.mrf.mxu0
    %v392 = vadd.f32 %v287, %v391
    %v393 = vpop.f32.mrf.mxu0
    %394 = vmatprep.mubr.f32.mxu0 0.0
    %395 = vmatmul.mubr.f32.gmra.mxu0 %v141
    %v396 = vpop.f32.mrf.mxu0
    %v397 = vadd.f32 %v292, %v396
    %v398 = vpop.f32.mrf.mxu0
    %399 = vdwg.mxu0
    %v400 = vld [vmem:[%s2] sm:$0xff]
    %v401 = vld [vmem:[%s2 + $0x8] sm:$0xff]
    %v402 = vld [vmem:[%s2 + $0x10] sm:$0xff]
    %v403 = vld [vmem:[%s2 + $0x18] sm:$0xff]
    %v404 = vld [vmem:[%s3] sm:$0xff]
    %v405 = vld [vmem:[%s3 + $0x8] sm:$0xff]
    %v406 = vld [vmem:[%s3 + $0x10] sm:$0xff]
    %v407 = vld [vmem:[%s3 + $0x18] sm:$0xff]
    %v408 = vld [vmem:[%s3 + $0x20] sm:$0xff]
    %v409 = vld [vmem:[%s3 + $0x28] sm:$0xff]
    %v410 = vld [vmem:[%s3 + $0x30] sm:$0xff]
    %v411 = vld [vmem:[%s3 + $0x38] sm:$0xff]
    %v412 = vld [vmem:[%s4] sm:$0x1]
    %v414 = vlaneseq
    %v415 = vshrl.u32 %v414, 7
    %v416 = vsub.s32 0, %v415
    %v417 = vrot.slane %v412, %v416
    %vm419 = vcmask 261120
    %v421 = vsel %vm419, 0.0, 0
    %423 = vmatprep.subr.mxu0 0.0
    %424 = vmatpush1.msra.mxu0 0.0
    %425 = vmatprep.subr.mxu0 0.0
    %426 = vmatpush1.msra.mxu0 0.0
    %427 = vmatprep.subr.mxu0 0.0
    %428 = vmatpush1.msra.mxu0 0.0
    %429 = vmatprep.subr.mxu0 0.0
    %430 = vmatpush1.msra.mxu0 0.0
    %431 = vmatprep.subr.mxu0 0.0
    %432 = vmatpush1.msra.mxu0 0.0
    %433 = vmatprep.subr.mxu0 0.0
    %434 = vmatpush1.msra.mxu0 0.0
    %435 = vmatprep.subr.mxu0 0.0
    %436 = vmatpush1.msra.mxu0 0.0
    %437 = vmatprep.subr.mxu0 0.0
    %438 = vmatpush1.msra.mxu0 0.0
    %439 = vmatprep.subr.mxu0 0.0
    %440 = vmatpush1.msra.mxu0 0.0
    %441 = vmatprep.subr.mxu0 0.0
    %442 = vmatpush1.msra.mxu0 0.0
    %443 = vmatprep.subr.mxu0 0.0
    %444 = vmatpush1.msra.mxu0 0.0
    %445 = vmatprep.subr.mxu0 0.0
    %446 = vmatpush1.msra.mxu0 0.0
    %447 = vmatprep.subr.mxu0 0.0
    %448 = vmatpush1.msra.mxu0 %v403
    %449 = vmatprep.subr.mxu0 0.0
    %450 = vmatpush1.msra.mxu0 %v402
    %451 = vmatprep.subr.mxu0 0.0
    %452 = vmatpush1.msra.mxu0 %v401
    %453 = vmatprep.subr.mxu0 0.0
    %454 = vmatpush1.msra.mxu0 %v400
    %455 = vmatprep.subr.mxu0 0.0
    %456 = vmatpush2.msra.mxu0 0.0
    %457 = vmatprep.subr.mxu0 0.0
    %458 = vmatpush2.msra.mxu0 0.0
    %459 = vmatprep.subr.mxu0 0.0
    %460 = vmatpush2.msra.mxu0 0.0
    %461 = vmatprep.subr.mxu0 0.0
    %462 = vmatpush2.msra.mxu0 0.0
    %463 = vmatprep.subr.mxu0 0.0
    %464 = vmatpush2.msra.mxu0 0.0
    %465 = vmatprep.subr.mxu0 0.0
    %466 = vmatpush2.msra.mxu0 0.0
    %467 = vmatprep.subr.mxu0 0.0
    %468 = vmatpush2.msra.mxu0 0.0
    %469 = vmatprep.subr.mxu0 0.0
    %470 = vmatpush2.msra.mxu0 0.0
    %471 = vmatprep.subr.mxu0 0.0
    %472 = vmatpush2.msra.mxu0 0.0
    %473 = vmatprep.subr.mxu0 0.0
    %474 = vmatpush2.msra.mxu0 0.0
    %475 = vmatprep.subr.mxu0 0.0
    %476 = vmatpush2.msra.mxu0 0.0
    %477 = vmatprep.subr.mxu0 0.0
    %478 = vmatpush2.msra.mxu0 0.0
    %479 = vmatprep.subr.mxu0 0.0
    %480 = vmatpush2.msra.mxu0 0.0
    %481 = vmatprep.subr.mxu0 0.0
    %482 = vmatpush2.msra.mxu0 0.0
    %483 = vmatprep.subr.mxu0 0.0
    %484 = vmatpush2.msra.mxu0 0.0
    %485 = vmatprep.subr.mxu0 0.0
    %486 = vmatpush2.msra.mxu0 0.0
    %487 = vmatprep.mubr.f32.mxu0 0.0
    %488 = vmatmul.mubr.f32.gmra.mxu0 %v421
    %v489 = vpop.f32.mrf.mxu0
    %v490 = vadd.f32 0.0, %v489
    %v491 = vpop.f32.mrf.mxu0
    %492 = vdwg.mxu0
    %v493 = vadd.f32 %v362, %v490
    %v494 = vxor.u32 %v493, 2147483648
    %v495 = vmul.f32 %v494, 1.442695
    %v496 = vpow.pop %v495
    %v497 = vadd.f32 %v496, 1.0
    %v498 = vrcp.pop %v497
    %v499 = vmul.f32 1.0, %v498
    %v500 = vtanh.pop %v493
    %v501 = vmul.f32 %v499, 0.0
    %503 = vrot.lane.b32.xlu0 %v500, 64
    %v504 = vpop.permute.xlu0 %503
    %v506 = vmul.f32 %v499, %v504
    %508 = vrot.lane.b32.xlu0 %v506, 32
    %v509 = vpop.permute.xlu0 %508
    %v511 = vadd.f32 %v501, %v509
    %v512 = vtanh.pop %v511
    %514 = vrot.lane.b32.xlu0 %v512, 64
    %v515 = vpop.permute.xlu0 %514
    %v517 = vmul.f32 %v499, %v515
    %519 = vrot.lane.b32.xlu0 %v517, 32
    %v520 = vpop.permute.xlu0 %519
    %v522 = vsel %vm419, %v520, 0.0
    %vm523 = vcmask 523264
    %v525 = vsel %vm523, %v522, 0
    %527 = vmatprep.subr.mxu0 0.0
    %528 = vmatpush1.msra.mxu0 0.0
    %529 = vmatprep.subr.mxu0 0.0
    %530 = vmatpush1.msra.mxu0 0.0
    %531 = vmatprep.subr.mxu0 0.0
    %532 = vmatpush1.msra.mxu0 0.0
    %533 = vmatprep.subr.mxu0 0.0
    %534 = vmatpush1.msra.mxu0 0.0
    %535 = vmatprep.subr.mxu0 0.0
    %536 = vmatpush1.msra.mxu0 0.0
    %537 = vmatprep.subr.mxu0 0.0
    %538 = vmatpush1.msra.mxu0 0.0
    %539 = vmatprep.subr.mxu0 0.0
    %540 = vmatpush1.msra.mxu0 0.0
    %541 = vmatprep.subr.mxu0 0.0
    %542 = vmatpush1.msra.mxu0 0.0
    %543 = vmatprep.subr.mxu0 0.0
    %544 = vmatpush1.msra.mxu0 %v411
    %545 = vmatprep.subr.mxu0 0.0
    %546 = vmatpush1.msra.mxu0 %v410
    %547 = vmatprep.subr.mxu0 0.0
    %548 = vmatpush1.msra.mxu0 %v409
    %549 = vmatprep.subr.mxu0 0.0
    %550 = vmatpush1.msra.mxu0 %v408
    %551 = vmatprep.subr.mxu0 0.0
    %552 = vmatpush1.msra.mxu0 %v407
    %553 = vmatprep.subr.mxu0 0.0
    %554 = vmatpush1.msra.mxu0 %v406
    %555 = vmatprep.subr.mxu0 0.0
    %556 = vmatpush1.msra.mxu0 %v405
    %557 = vmatprep.subr.mxu0 0.0
    %558 = vmatpush1.msra.mxu0 %v404
    %559 = vmatprep.subr.mxu0 0.0
    %560 = vmatpush2.msra.mxu0 0.0
    %561 = vmatprep.subr.mxu0 0.0
    %562 = vmatpush2.msra.mxu0 0.0
    %563 = vmatprep.subr.mxu0 0.0
    %564 = vmatpush2.msra.mxu0 0.0
    %565 = vmatprep.subr.mxu0 0.0
    %566 = vmatpush2.msra.mxu0 0.0
    %567 = vmatprep.subr.mxu0 0.0
    %568 = vmatpush2.msra.mxu0 0.0
    %569 = vmatprep.subr.mxu0 0.0
    %570 = vmatpush2.msra.mxu0 0.0
    %571 = vmatprep.subr.mxu0 0.0
    %572 = vmatpush2.msra.mxu0 0.0
    %573 = vmatprep.subr.mxu0 0.0
    %574 = vmatpush2.msra.mxu0 0.0
    %575 = vmatprep.subr.mxu0 0.0
    %576 = vmatpush2.msra.mxu0 0.0
    %577 = vmatprep.subr.mxu0 0.0
    %578 = vmatpush2.msra.mxu0 0.0
    %579 = vmatprep.subr.mxu0 0.0
    %580 = vmatpush2.msra.mxu0 0.0
    %581 = vmatprep.subr.mxu0 0.0
    %582 = vmatpush2.msra.mxu0 0.0
    %583 = vmatprep.subr.mxu0 0.0
    %584 = vmatpush2.msra.mxu0 0.0
    %585 = vmatprep.subr.mxu0 0.0
    %586 = vmatpush2.msra.mxu0 0.0
    %587 = vmatprep.subr.mxu0 0.0
    %588 = vmatpush2.msra.mxu0 0.0
    %589 = vmatprep.subr.mxu0 0.0
    %590 = vmatpush2.msra.mxu0 0.0
    %591 = vmatprep.mubr.f32.mxu0 0.0
    %592 = vmatmul.mubr.f32.gmra.mxu0 %v525
    %v593 = vpop.f32.mrf.mxu0
    %v594 = vadd.f32 %v417, %v593
    %v595 = vpop.f32.mrf.mxu0
    %596 = vdwg.mxu0
    %v597 = vxor.u32 %v594, 2147483648
    %v598 = vmul.f32 %v597, 1.442695
    %v599 = vpow.pop %v598
    %v600 = vadd.f32 %v599, 1.0
    %v601 = vrcp.pop %v600
    %v602 = vmul.f32 1.0, %v601
    %v603 = vtanh.pop %v594
    %v604 = vmul.f32 %v602, 0.0
    %606 = vrot.lane.b32.xlu0 %v603, 64
    %v607 = vpop.permute.xlu0 %606
    %v609 = vmul.f32 %v602, %v607
    %611 = vrot.lane.b32.xlu0 %v609, 32
    %v612 = vpop.permute.xlu0 %611
    %v614 = vadd.f32 %v604, %v612
    %v615 = vtanh.pop %v614
    %617 = vrot.lane.b32.xlu0 %v615, 64
    %v618 = vpop.permute.xlu0 %617
    %v620 = vmul.f32 %v602, %v618
    %v621 = vsel %vm419, %v520, 0
    %623 = vmatprep.subr.mxu0 0.0
    %624 = vmatpush1.msra.mxu0 0.0
    %625 = vmatprep.subr.mxu0 0.0
    %626 = vmatpush1.msra.mxu0 0.0
    %627 = vmatprep.subr.mxu0 0.0
    %628 = vmatpush1.msra.mxu0 0.0
    %629 = vmatprep.subr.mxu0 0.0
    %630 = vmatpush1.msra.mxu0 0.0
    %631 = vmatprep.subr.mxu0 0.0
    %632 = vmatpush1.msra.mxu0 0.0
    %633 = vmatprep.subr.mxu0 0.0
    %634 = vmatpush1.msra.mxu0 0.0
    %635 = vmatprep.subr.mxu0 0.0
    %636 = vmatpush1.msra.mxu0 0.0
    %637 = vmatprep.subr.mxu0 0.0
    %638 = vmatpush1.msra.mxu0 0.0
    %639 = vmatprep.subr.mxu0 0.0
    %640 = vmatpush1.msra.mxu0 0.0
    %641 = vmatprep.subr.mxu0 0.0
    %642 = vmatpush1.msra.mxu0 0.0
    %643 = vmatprep.subr.mxu0 0.0
    %644 = vmatpush1.msra.mxu0 0.0
    %645 = vmatprep.subr.mxu0 0.0
    %646 = vmatpush1.msra.mxu0 0.0
    %647 = vmatprep.subr.mxu0 0.0
    %648 = vmatpush1.msra.mxu0 %v403
    %649 = vmatprep.subr.mxu0 0.0
    %650 = vmatpush1.msra.mxu0 %v402
    %651 = vmatprep.subr.mxu0 0.0
    %652 = vmatpush1.msra.mxu0 %v401
    %653 = vmatprep.subr.mxu0 0.0
    %654 = vmatpush1.msra.mxu0 %v400
    %655 = vmatprep.subr.mxu0 0.0
    %656 = vmatpush2.msra.mxu0 0.0
    %657 = vmatprep.subr.mxu0 0.0
    %658 = vmatpush2.msra.mxu0 0.0
    %659 = vmatprep.subr.mxu0 0.0
    %660 = vmatpush2.msra.mxu0 0.0
    %661 = vmatprep.subr.mxu0 0.0
    %662 = vmatpush2.msra.mxu0 0.0
    %663 = vmatprep.subr.mxu0 0.0
    %664 = vmatpush2.msra.mxu0 0.0
    %665 = vmatprep.subr.mxu0 0.0
    %666 = vmatpush2.msra.mxu0 0.0
    %667 = vmatprep.subr.mxu0 0.0
    %668 = vmatpush2.msra.mxu0 0.0
    %669 = vmatprep.subr.mxu0 0.0
    %670 = vmatpush2.msra.mxu0 0.0
    %671 = vmatprep.subr.mxu0 0.0
    %672 = vmatpush2.msra.mxu0 0.0
    %673 = vmatprep.subr.mxu0 0.0
    %674 = vmatpush2.msra.mxu0 0.0
    %675 = vmatprep.subr.mxu0 0.0
    %676 = vmatpush2.msra.mxu0 0.0
    %677 = vmatprep.subr.mxu0 0.0
    %678 = vmatpush2.msra.mxu0 0.0
    %679 = vmatprep.subr.mxu0 0.0
    %680 = vmatpush2.msra.mxu0 0.0
    %681 = vmatprep.subr.mxu0 0.0
    %682 = vmatpush2.msra.mxu0 0.0
    %683 = vmatprep.subr.mxu0 0.0
    %684 = vmatpush2.msra.mxu0 0.0
    %685 = vmatprep.subr.mxu0 0.0
    %686 = vmatpush2.msra.mxu0 0.0
    %687 = vmatprep.mubr.f32.mxu0 0.0
    %688 = vmatmul.mubr.f32.gmra.mxu0 %v621
    %v689 = vpop.f32.mrf.mxu0
    %v690 = vadd.f32 0.0, %v689
    %v691 = vpop.f32.mrf.mxu0
    %692 = vdwg.mxu0
    %v693 = vadd.f32 %v367, %v690
    %v694 = vxor.u32 %v693, 2147483648
    %v695 = vmul.f32 %v694, 1.442695
    %v696 = vpow.pop %v695
    %v697 = vadd.f32 %v696, 1.0
    %v698 = vrcp.pop %v697
    %v699 = vmul.f32 1.0, %v698
    %v700 = vtanh.pop %v693
    %v701 = vmul.f32 %v699, %v511
    %703 = vrot.lane.b32.xlu0 %v700, 64
    %v704 = vpop.permute.xlu0 %703
    %v706 = vmul.f32 %v699, %v704
    %708 = vrot.lane.b32.xlu0 %v706, 32
    %v709 = vpop.permute.xlu0 %708
    %v711 = vadd.f32 %v701, %v709
    %v712 = vtanh.pop %v711
    %714 = vrot.lane.b32.xlu0 %v712, 64
    %v715 = vpop.permute.xlu0 %714
    %v717 = vmul.f32 %v699, %v715
    %719 = vrot.lane.b32.xlu0 %v717, 32
    %v720 = vpop.permute.xlu0 %719
    %723 = vrot.lane.b32.xlu0 %v620, 64
    %v724 = vpop.permute.xlu0 %723
    %v726 = vsel %vm419, %v720, %v724
    %v728 = vsel %vm523, %v726, 0
    %730 = vmatprep.subr.mxu0 0.0
    %731 = vmatpush1.msra.mxu0 0.0
    %732 = vmatprep.subr.mxu0 0.0
    %733 = vmatpush1.msra.mxu0 0.0
    %734 = vmatprep.subr.mxu0 0.0
    %735 = vmatpush1.msra.mxu0 0.0
    %736 = vmatprep.subr.mxu0 0.0
    %737 = vmatpush1.msra.mxu0 0.0
    %738 = vmatprep.subr.mxu0 0.0
    %739 = vmatpush1.msra.mxu0 0.0
    %740 = vmatprep.subr.mxu0 0.0
    %741 = vmatpush1.msra.mxu0 0.0
    %742 = vmatprep.subr.mxu0 0.0
    %743 = vmatpush1.msra.mxu0 0.0
    %744 = vmatprep.subr.mxu0 0.0
    %745 = vmatpush1.msra.mxu0 0.0
    %746 = vmatprep.subr.mxu0 0.0
    %747 = vmatpush1.msra.mxu0 %v411
    %748 = vmatprep.subr.mxu0 0.0
    %749 = vmatpush1.msra.mxu0 %v410
    %750 = vmatprep.subr.mxu0 0.0
    %751 = vmatpush1.msra.mxu0 %v409
    %752 = vmatprep.subr.mxu0 0.0
    %753 = vmatpush1.msra.mxu0 %v408
    %754 = vmatprep.subr.mxu0 0.0
    %755 = vmatpush1.msra.mxu0 %v407
    %756 = vmatprep.subr.mxu0 0.0
    %757 = vmatpush1.msra.mxu0 %v406
    %758 = vmatprep.subr.mxu0 0.0
    %759 = vmatpush1.msra.mxu0 %v405
    %760 = vmatprep.subr.mxu0 0.0
    %761 = vmatpush1.msra.mxu0 %v404
    %762 = vmatprep.subr.mxu0 0.0
    %763 = vmatpush2.msra.mxu0 0.0
    %764 = vmatprep.subr.mxu0 0.0
    %765 = vmatpush2.msra.mxu0 0.0
    %766 = vmatprep.subr.mxu0 0.0
    %767 = vmatpush2.msra.mxu0 0.0
    %768 = vmatprep.subr.mxu0 0.0
    %769 = vmatpush2.msra.mxu0 0.0
    %770 = vmatprep.subr.mxu0 0.0
    %771 = vmatpush2.msra.mxu0 0.0
    %772 = vmatprep.subr.mxu0 0.0
    %773 = vmatpush2.msra.mxu0 0.0
    %774 = vmatprep.subr.mxu0 0.0
    %775 = vmatpush2.msra.mxu0 0.0
    %776 = vmatprep.subr.mxu0 0.0
    %777 = vmatpush2.msra.mxu0 0.0
    %778 = vmatprep.subr.mxu0 0.0
    %779 = vmatpush2.msra.mxu0 0.0
    %780 = vmatprep.subr.mxu0 0.0
    %781 = vmatpush2.msra.mxu0 0.0
    %782 = vmatprep.subr.mxu0 0.0
    %783 = vmatpush2.msra.mxu0 0.0
    %784 = vmatprep.subr.mxu0 0.0
    %785 = vmatpush2.msra.mxu0 0.0
    %786 = vmatprep.subr.mxu0 0.0
    %787 = vmatpush2.msra.mxu0 0.0
    %788 = vmatprep.subr.mxu0 0.0
    %789 = vmatpush2.msra.mxu0 0.0
    %790 = vmatprep.subr.mxu0 0.0
    %791 = vmatpush2.msra.mxu0 0.0
    %792 = vmatprep.subr.mxu0 0.0
    %793 = vmatpush2.msra.mxu0 0.0
    %794 = vmatprep.mubr.f32.mxu0 0.0
    %795 = vmatmul.mubr.f32.gmra.mxu0 %v728
    %v796 = vpop.f32.mrf.mxu0
    %v797 = vadd.f32 %v417, %v796
    %v798 = vpop.f32.mrf.mxu0
    %799 = vdwg.mxu0
    %v800 = vxor.u32 %v797, 2147483648
    %v801 = vmul.f32 %v800, 1.442695
    %v802 = vpow.pop %v801
    %v803 = vadd.f32 %v802, 1.0
    %v804 = vrcp.pop %v803
    %v805 = vmul.f32 1.0, %v804
    %v806 = vtanh.pop %v797
    %v807 = vmul.f32 %v805, %v614
    %809 = vrot.lane.b32.xlu0 %v806, 64
    %v810 = vpop.permute.xlu0 %809
    %v812 = vmul.f32 %v805, %v810
    %814 = vrot.lane.b32.xlu0 %v812, 32
    %v815 = vpop.permute.xlu0 %814
    %v817 = vadd.f32 %v807, %v815
    %v818 = vtanh.pop %v817
    %820 = vrot.lane.b32.xlu0 %v818, 64
    %v821 = vpop.permute.xlu0 %820
    %v823 = vmul.f32 %v805, %v821
    %v824 = vsel %vm419, %v720, 0
    %826 = vmatprep.subr.mxu0 0.0
    %827 = vmatpush1.msra.mxu0 0.0
    %828 = vmatprep.subr.mxu0 0.0
    %829 = vmatpush1.msra.mxu0 0.0
    %830 = vmatprep.subr.mxu0 0.0
    %831 = vmatpush1.msra.mxu0 0.0
    %832 = vmatprep.subr.mxu0 0.0
    %833 = vmatpush1.msra.mxu0 0.0
    %834 = vmatprep.subr.mxu0 0.0
    %835 = vmatpush1.msra.mxu0 0.0
    %836 = vmatprep.subr.mxu0 0.0
    %837 = vmatpush1.msra.mxu0 0.0
    %838 = vmatprep.subr.mxu0 0.0
    %839 = vmatpush1.msra.mxu0 0.0
    %840 = vmatprep.subr.mxu0 0.0
    %841 = vmatpush1.msra.mxu0 0.0
    %842 = vmatprep.subr.mxu0 0.0
    %843 = vmatpush1.msra.mxu0 0.0
    %844 = vmatprep.subr.mxu0 0.0
    %845 = vmatpush1.msra.mxu0 0.0
    %846 = vmatprep.subr.mxu0 0.0
    %847 = vmatpush1.msra.mxu0 0.0
    %848 = vmatprep.subr.mxu0 0.0
    %849 = vmatpush1.msra.mxu0 0.0
    %850 = vmatprep.subr.mxu0 0.0
    %851 = vmatpush1.msra.mxu0 %v403
    %852 = vmatprep.subr.mxu0 0.0
    %853 = vmatpush1.msra.mxu0 %v402
    %854 = vmatprep.subr.mxu0 0.0
    %855 = vmatpush1.msra.mxu0 %v401
    %856 = vmatprep.subr.mxu0 0.0
    %857 = vmatpush1.msra.mxu0 %v400
    %858 = vmatprep.subr.mxu0 0.0
    %859 = vmatpush2.msra.mxu0 0.0
    %860 = vmatprep.subr.mxu0 0.0
    %861 = vmatpush2.msra.mxu0 0.0
    %862 = vmatprep.subr.mxu0 0.0
    %863 = vmatpush2.msra.mxu0 0.0
    %864 = vmatprep.subr.mxu0 0.0
    %865 = vmatpush2.msra.mxu0 0.0
    %866 = vmatprep.subr.mxu0 0.0
    %867 = vmatpush2.msra.mxu0 0.0
    %868 = vmatprep.subr.mxu0 0.0
    %869 = vmatpush2.msra.mxu0 0.0
    %870 = vmatprep.subr.mxu0 0.0
    %871 = vmatpush2.msra.mxu0 0.0
    %872 = vmatprep.subr.mxu0 0.0
    %873 = vmatpush2.msra.mxu0 0.0
    %874 = vmatprep.subr.mxu0 0.0
    %875 = vmatpush2.msra.mxu0 0.0
    %876 = vmatprep.subr.mxu0 0.0
    %877 = vmatpush2.msra.mxu0 0.0
    %878 = vmatprep.subr.mxu0 0.0
    %879 = vmatpush2.msra.mxu0 0.0
    %880 = vmatprep.subr.mxu0 0.0
    %881 = vmatpush2.msra.mxu0 0.0
    %882 = vmatprep.subr.mxu0 0.0
    %883 = vmatpush2.msra.mxu0 0.0
    %884 = vmatprep.subr.mxu0 0.0
    %885 = vmatpush2.msra.mxu0 0.0
    %886 = vmatprep.subr.mxu0 0.0
    %887 = vmatpush2.msra.mxu0 0.0
    %888 = vmatprep.subr.mxu0 0.0
    %889 = vmatpush2.msra.mxu0 0.0
    %890 = vmatprep.mubr.f32.mxu0 0.0
    %891 = vmatmul.mubr.f32.gmra.mxu0 %v824
    %v892 = vpop.f32.mrf.mxu0
    %v893 = vadd.f32 0.0, %v892
    %v894 = vpop.f32.mrf.mxu0
    %895 = vdwg.mxu0
    %v896 = vadd.f32 %v372, %v893
    %v897 = vxor.u32 %v896, 2147483648
    %v898 = vmul.f32 %v897, 1.442695
    %v899 = vpow.pop %v898
    %v900 = vadd.f32 %v899, 1.0
    %v901 = vrcp.pop %v900
    %v902 = vmul.f32 1.0, %v901
    %v903 = vtanh.pop %v896
    %v904 = vmul.f32 %v902, %v711
    %906 = vrot.lane.b32.xlu0 %v903, 64
    %v907 = vpop.permute.xlu0 %906
    %v909 = vmul.f32 %v902, %v907
    %911 = vrot.lane.b32.xlu0 %v909, 32
    %v912 = vpop.permute.xlu0 %911
    %v914 = vadd.f32 %v904, %v912
    %v915 = vtanh.pop %v914
    %917 = vrot.lane.b32.xlu0 %v915, 64
    %v918 = vpop.permute.xlu0 %917
    %v920 = vmul.f32 %v902, %v918
    %922 = vrot.lane.b32.xlu0 %v920, 32
    %v923 = vpop.permute.xlu0 %922
    %926 = vrot.lane.b32.xlu0 %v823, 64
    %v927 = vpop.permute.xlu0 %926
    %v929 = vsel %vm419, %v923, %v927
    %v931 = vsel %vm523, %v929, 0
    %933 = vmatprep.subr.mxu0 0.0
    %934 = vmatpush1.msra.mxu0 0.0
    %935 = vmatprep.subr.mxu0 0.0
    %936 = vmatpush1.msra.mxu0 0.0
    %937 = vmatprep.subr.mxu0 0.0
    %938 = vmatpush1.msra.mxu0 0.0
    %939 = vmatprep.subr.mxu0 0.0
    %940 = vmatpush1.msra.mxu0 0.0
    %941 = vmatprep.subr.mxu0 0.0
    %942 = vmatpush1.msra.mxu0 0.0
    %943 = vmatprep.subr.mxu0 0.0
    %944 = vmatpush1.msra.mxu0 0.0
    %945 = vmatprep.subr.mxu0 0.0
    %946 = vmatpush1.msra.mxu0 0.0
    %947 = vmatprep.subr.mxu0 0.0
    %948 = vmatpush1.msra.mxu0 0.0
    %949 = vmatprep.subr.mxu0 0.0
    %950 = vmatpush1.msra.mxu0 %v411
    %951 = vmatprep.subr.mxu0 0.0
    %952 = vmatpush1.msra.mxu0 %v410
    %953 = vmatprep.subr.mxu0 0.0
    %954 = vmatpush1.msra.mxu0 %v409
    %955 = vmatprep.subr.mxu0 0.0
    %956 = vmatpush1.msra.mxu0 %v408
    %957 = vmatprep.subr.mxu0 0.0
    %958 = vmatpush1.msra.mxu0 %v407
    %959 = vmatprep.subr.mxu0 0.0
    %960 = vmatpush1.msra.mxu0 %v406
    %961 = vmatprep.subr.mxu0 0.0
    %962 = vmatpush1.msra.mxu0 %v405
    %963 = vmatprep.subr.mxu0 0.0
    %964 = vmatpush1.msra.mxu0 %v404
    %965 = vmatprep.subr.mxu0 0.0
    %966 = vmatpush2.msra.mxu0 0.0
    %967 = vmatprep.subr.mxu0 0.0
    %968 = vmatpush2.msra.mxu0 0.0
    %969 = vmatprep.subr.mxu0 0.0
    %970 = vmatpush2.msra.mxu0 0.0
    %971 = vmatprep.subr.mxu0 0.0
    %972 = vmatpush2.msra.mxu0 0.0
    %973 = vmatprep.subr.mxu0 0.0
    %974 = vmatpush2.msra.mxu0 0.0
    %975 = vmatprep.subr.mxu0 0.0
    %976 = vmatpush2.msra.mxu0 0.0
    %977 = vmatprep.subr.mxu0 0.0
    %978 = vmatpush2.msra.mxu0 0.0
    %979 = vmatprep.subr.mxu0 0.0
    %980 = vmatpush2.msra.mxu0 0.0
    %981 = vmatprep.subr.mxu0 0.0
    %982 = vmatpush2.msra.mxu0 0.0
    %983 = vmatprep.subr.mxu0 0.0
    %984 = vmatpush2.msra.mxu0 0.0
    %985 = vmatprep.subr.mxu0 0.0
    %986 = vmatpush2.msra.mxu0 0.0
    %987 = vmatprep.subr.mxu0 0.0
    %988 = vmatpush2.msra.mxu0 0.0
    %989 = vmatprep.subr.mxu0 0.0
    %990 = vmatpush2.msra.mxu0 0.0
    %991 = vmatprep.subr.mxu0 0.0
    %992 = vmatpush2.msra.mxu0 0.0
    %993 = vmatprep.subr.mxu0 0.0
    %994 = vmatpush2.msra.mxu0 0.0
    %995 = vmatprep.subr.mxu0 0.0
    %996 = vmatpush2.msra.mxu0 0.0
    %997 = vmatprep.mubr.f32.mxu0 0.0
    %998 = vmatmul.mubr.f32.gmra.mxu0 %v931
    %v999 = vpop.f32.mrf.mxu0
    %v1000 = vadd.f32 %v417, %v999
    %v1001 = vpop.f32.mrf.mxu0
    %1002 = vdwg.mxu0
    %v1003 = vxor.u32 %v1000, 2147483648
    %v1004 = vmul.f32 %v1003, 1.442695
    %v1005 = vpow.pop %v1004
    %v1006 = vadd.f32 %v1005, 1.0
    %v1007 = vrcp.pop %v1006
    %v1008 = vmul.f32 1.0, %v1007
    %v1009 = vtanh.pop %v1000
    %v1010 = vmul.f32 %v1008, %v817
    %1012 = vrot.lane.b32.xlu0 %v1009, 64
    %v1013 = vpop.permute.xlu0 %1012
    %v1015 = vmul.f32 %v1008, %v1013
    %1017 = vrot.lane.b32.xlu0 %v1015, 32
    %v1018 = vpop.permute.xlu0 %1017
    %v1020 = vadd.f32 %v1010, %v1018
    %v1021 = vtanh.pop %v1020
    %1023 = vrot.lane.b32.xlu0 %v1021, 64
    %v1024 = vpop.permute.xlu0 %1023
    %v1026 = vmul.f32 %v1008, %v1024
    %v1027 = vsel %vm419, %v923, 0
    %1029 = vmatprep.subr.mxu0 0.0
    %1030 = vmatpush1.msra.mxu0 0.0
    %1031 = vmatprep.subr.mxu0 0.0
    %1032 = vmatpush1.msra.mxu0 0.0
    %1033 = vmatprep.subr.mxu0 0.0
    %1034 = vmatpush1.msra.mxu0 0.0
    %1035 = vmatprep.subr.mxu0 0.0
    %1036 = vmatpush1.msra.mxu0 0.0
    %1037 = vmatprep.subr.mxu0 0.0
    %1038 = vmatpush1.msra.mxu0 0.0
    %1039 = vmatprep.subr.mxu0 0.0
    %1040 = vmatpush1.msra.mxu0 0.0
    %1041 = vmatprep.subr.mxu0 0.0
    %1042 = vmatpush1.msra.mxu0 0.0
    %1043 = vmatprep.subr.mxu0 0.0
    %1044 = vmatpush1.msra.mxu0 0.0
    %1045 = vmatprep.subr.mxu0 0.0
    %1046 = vmatpush1.msra.mxu0 0.0
    %1047 = vmatprep.subr.mxu0 0.0
    %1048 = vmatpush1.msra.mxu0 0.0
    %1049 = vmatprep.subr.mxu0 0.0
    %1050 = vmatpush1.msra.mxu0 0.0
    %1051 = vmatprep.subr.mxu0 0.0
    %1052 = vmatpush1.msra.mxu0 0.0
    %1053 = vmatprep.subr.mxu0 0.0
    %1054 = vmatpush1.msra.mxu0 %v403
    %1055 = vmatprep.subr.mxu0 0.0
    %1056 = vmatpush1.msra.mxu0 %v402
    %1057 = vmatprep.subr.mxu0 0.0
    %1058 = vmatpush1.msra.mxu0 %v401
    %1059 = vmatprep.subr.mxu0 0.0
    %1060 = vmatpush1.msra.mxu0 %v400
    %1061 = vmatprep.subr.mxu0 0.0
    %1062 = vmatpush2.msra.mxu0 0.0
    %1063 = vmatprep.subr.mxu0 0.0
    %1064 = vmatpush2.msra.mxu0 0.0
    %1065 = vmatprep.subr.mxu0 0.0
    %1066 = vmatpush2.msra.mxu0 0.0
    %1067 = vmatprep.subr.mxu0 0.0
    %1068 = vmatpush2.msra.mxu0 0.0
    %1069 = vmatprep.subr.mxu0 0.0
    %1070 = vmatpush2.msra.mxu0 0.0
    %1071 = vmatprep.subr.mxu0 0.0
    %1072 = vmatpush2.msra.mxu0 0.0
    %1073 = vmatprep.subr.mxu0 0.0
    %1074 = vmatpush2.msra.mxu0 0.0
    %1075 = vmatprep.subr.mxu0 0.0
    %1076 = vmatpush2.msra.mxu0 0.0
    %1077 = vmatprep.subr.mxu0 0.0
    %1078 = vmatpush2.msra.mxu0 0.0
    %1079 = vmatprep.subr.mxu0 0.0
    %1080 = vmatpush2.msra.mxu0 0.0
    %1081 = vmatprep.subr.mxu0 0.0
    %1082 = vmatpush2.msra.mxu0 0.0
    %1083 = vmatprep.subr.mxu0 0.0
    %1084 = vmatpush2.msra.mxu0 0.0
    %1085 = vmatprep.subr.mxu0 0.0
    %1086 = vmatpush2.msra.mxu0 0.0
    %1087 = vmatprep.subr.mxu0 0.0
    %1088 = vmatpush2.msra.mxu0 0.0
    %1089 = vmatprep.subr.mxu0 0.0
    %1090 = vmatpush2.msra.mxu0 0.0
    %1091 = vmatprep.subr.mxu0 0.0
    %1092 = vmatpush2.msra.mxu0 0.0
    %1093 = vmatprep.mubr.f32.mxu0 0.0
    %1094 = vmatmul.mubr.f32.gmra.mxu0 %v1027
    %v1095 = vpop.f32.mrf.mxu0
    %v1096 = vadd.f32 0.0, %v1095
    %v1097 = vpop.f32.mrf.mxu0
    %1098 = vdwg.mxu0
    %v1099 = vadd.f32 %v377, %v1096
    %v1100 = vxor.u32 %v1099, 2147483648
    %v1101 = vmul.f32 %v1100, 1.442695
    %v1102 = vpow.pop %v1101
    %v1103 = vadd.f32 %v1102, 1.0
    %v1104 = vrcp.pop %v1103
    %v1105 = vmul.f32 1.0, %v1104
    %v1106 = vtanh.pop %v1099
    %v1107 = vmul.f32 %v1105, %v914
    %1109 = vrot.lane.b32.xlu0 %v1106, 64
    %v1110 = vpop.permute.xlu0 %1109
    %v1112 = vmul.f32 %v1105, %v1110
    %1114 = vrot.lane.b32.xlu0 %v1112, 32
    %v1115 = vpop.permute.xlu0 %1114
    %v1117 = vadd.f32 %v1107, %v1115
    %v1118 = vtanh.pop %v1117
    %1120 = vrot.lane.b32.xlu0 %v1118, 64
    %v1121 = vpop.permute.xlu0 %1120
    %v1123 = vmul.f32 %v1105, %v1121
    %1125 = vrot.lane.b32.xlu0 %v1123, 32
    %v1126 = vpop.permute.xlu0 %1125
    %1129 = vrot.lane.b32.xlu0 %v1026, 64
    %v1130 = vpop.permute.xlu0 %1129
    %v1132 = vsel %vm419, %v1126, %v1130
    %v1134 = vsel %vm523, %v1132, 0
    %1136 = vmatprep.subr.mxu0 0.0
    %1137 = vmatpush1.msra.mxu0 0.0
    %1138 = vmatprep.subr.mxu0 0.0
    %1139 = vmatpush1.msra.mxu0 0.0
    %1140 = vmatprep.subr.mxu0 0.0
    %1141 = vmatpush1.msra.mxu0 0.0
    %1142 = vmatprep.subr.mxu0 0.0
    %1143 = vmatpush1.msra.mxu0 0.0
    %1144 = vmatprep.subr.mxu0 0.0
    %1145 = vmatpush1.msra.mxu0 0.0
    %1146 = vmatprep.subr.mxu0 0.0
    %1147 = vmatpush1.msra.mxu0 0.0
    %1148 = vmatprep.subr.mxu0 0.0
    %1149 = vmatpush1.msra.mxu0 0.0
    %1150 = vmatprep.subr.mxu0 0.0
    %1151 = vmatpush1.msra.mxu0 0.0
    %1152 = vmatprep.subr.mxu0 0.0
    %1153 = vmatpush1.msra.mxu0 %v411
    %1154 = vmatprep.subr.mxu0 0.0
    %1155 = vmatpush1.msra.mxu0 %v410
    %1156 = vmatprep.subr.mxu0 0.0
    %1157 = vmatpush1.msra.mxu0 %v409
    %1158 = vmatprep.subr.mxu0 0.0
    %1159 = vmatpush1.msra.mxu0 %v408
    %1160 = vmatprep.subr.mxu0 0.0
    %1161 = vmatpush1.msra.mxu0 %v407
    %1162 = vmatprep.subr.mxu0 0.0
    %1163 = vmatpush1.msra.mxu0 %v406
    %1164 = vmatprep.subr.mxu0 0.0
    %1165 = vmatpush1.msra.mxu0 %v405
    %1166 = vmatprep.subr.mxu0 0.0
    %1167 = vmatpush1.msra.mxu0 %v404
    %1168 = vmatprep.subr.mxu0 0.0
    %1169 = vmatpush2.msra.mxu0 0.0
    %1170 = vmatprep.subr.mxu0 0.0
    %1171 = vmatpush2.msra.mxu0 0.0
    %1172 = vmatprep.subr.mxu0 0.0
    %1173 = vmatpush2.msra.mxu0 0.0
    %1174 = vmatprep.subr.mxu0 0.0
    %1175 = vmatpush2.msra.mxu0 0.0
    %1176 = vmatprep.subr.mxu0 0.0
    %1177 = vmatpush2.msra.mxu0 0.0
    %1178 = vmatprep.subr.mxu0 0.0
    %1179 = vmatpush2.msra.mxu0 0.0
    %1180 = vmatprep.subr.mxu0 0.0
    %1181 = vmatpush2.msra.mxu0 0.0
    %1182 = vmatprep.subr.mxu0 0.0
    %1183 = vmatpush2.msra.mxu0 0.0
    %1184 = vmatprep.subr.mxu0 0.0
    %1185 = vmatpush2.msra.mxu0 0.0
    %1186 = vmatprep.subr.mxu0 0.0
    %1187 = vmatpush2.msra.mxu0 0.0
    %1188 = vmatprep.subr.mxu0 0.0
    %1189 = vmatpush2.msra.mxu0 0.0
    %1190 = vmatprep.subr.mxu0 0.0
    %1191 = vmatpush2.msra.mxu0 0.0
    %1192 = vmatprep.subr.mxu0 0.0
    %1193 = vmatpush2.msra.mxu0 0.0
    %1194 = vmatprep.subr.mxu0 0.0
    %1195 = vmatpush2.msra.mxu0 0.0
    %1196 = vmatprep.subr.mxu0 0.0
    %1197 = vmatpush2.msra.mxu0 0.0
    %1198 = vmatprep.subr.mxu0 0.0
    %1199 = vmatpush2.msra.mxu0 0.0
    %1200 = vmatprep.mubr.f32.mxu0 0.0
    %1201 = vmatmul.mubr.f32.gmra.mxu0 %v1134
    %v1202 = vpop.f32.mrf.mxu0
    %v1203 = vadd.f32 %v417, %v1202
    %v1204 = vpop.f32.mrf.mxu0
    %1205 = vdwg.mxu0
    %v1206 = vxor.u32 %v1203, 2147483648
    %v1207 = vmul.f32 %v1206, 1.442695
    %v1208 = vpow.pop %v1207
    %v1209 = vadd.f32 %v1208, 1.0
    %v1210 = vrcp.pop %v1209
    %v1211 = vmul.f32 1.0, %v1210
    %v1212 = vtanh.pop %v1203
    %v1213 = vmul.f32 %v1211, %v1020
    %1215 = vrot.lane.b32.xlu0 %v1212, 64
    %v1216 = vpop.permute.xlu0 %1215
    %v1218 = vmul.f32 %v1211, %v1216
    %1220 = vrot.lane.b32.xlu0 %v1218, 32
    %v1221 = vpop.permute.xlu0 %1220
    %v1223 = vadd.f32 %v1213, %v1221
    %v1224 = vtanh.pop %v1223
    %1226 = vrot.lane.b32.xlu0 %v1224, 64
    %v1227 = vpop.permute.xlu0 %1226
    %v1229 = vmul.f32 %v1211, %v1227
    %v1230 = vsel %vm419, %v1126, 0
    %1232 = vmatprep.subr.mxu0 0.0
    %1233 = vmatpush1.msra.mxu0 0.0
    %1234 = vmatprep.subr.mxu0 0.0
    %1235 = vmatpush1.msra.mxu0 0.0
    %1236 = vmatprep.subr.mxu0 0.0
    %1237 = vmatpush1.msra.mxu0 0.0
    %1238 = vmatprep.subr.mxu0 0.0
    %1239 = vmatpush1.msra.mxu0 0.0
    %1240 = vmatprep.subr.mxu0 0.0
    %1241 = vmatpush1.msra.mxu0 0.0
    %1242 = vmatprep.subr.mxu0 0.0
    %1243 = vmatpush1.msra.mxu0 0.0
    %1244 = vmatprep.subr.mxu0 0.0
    %1245 = vmatpush1.msra.mxu0 0.0
    %1246 = vmatprep.subr.mxu0 0.0
    %1247 = vmatpush1.msra.mxu0 0.0
    %1248 = vmatprep.subr.mxu0 0.0
    %1249 = vmatpush1.msra.mxu0 0.0
    %1250 = vmatprep.subr.mxu0 0.0
    %1251 = vmatpush1.msra.mxu0 0.0
    %1252 = vmatprep.subr.mxu0 0.0
    %1253 = vmatpush1.msra.mxu0 0.0
    %1254 = vmatprep.subr.mxu0 0.0
    %1255 = vmatpush1.msra.mxu0 0.0
    %1256 = vmatprep.subr.mxu0 0.0
    %1257 = vmatpush1.msra.mxu0 %v403
    %1258 = vmatprep.subr.mxu0 0.0
    %1259 = vmatpush1.msra.mxu0 %v402
    %1260 = vmatprep.subr.mxu0 0.0
    %1261 = vmatpush1.msra.mxu0 %v401
    %1262 = vmatprep.subr.mxu0 0.0
    %1263 = vmatpush1.msra.mxu0 %v400
    %1264 = vmatprep.subr.mxu0 0.0
    %1265 = vmatpush2.msra.mxu0 0.0
    %1266 = vmatprep.subr.mxu0 0.0
    %1267 = vmatpush2.msra.mxu0 0.0
    %1268 = vmatprep.subr.mxu0 0.0
    %1269 = vmatpush2.msra.mxu0 0.0
    %1270 = vmatprep.subr.mxu0 0.0
    %1271 = vmatpush2.msra.mxu0 0.0
    %1272 = vmatprep.subr.mxu0 0.0
    %1273 = vmatpush2.msra.mxu0 0.0
    %1274 = vmatprep.subr.mxu0 0.0
    %1275 = vmatpush2.msra.mxu0 0.0
    %1276 = vmatprep.subr.mxu0 0.0
    %1277 = vmatpush2.msra.mxu0 0.0
    %1278 = vmatprep.subr.mxu0 0.0
    %1279 = vmatpush2.msra.mxu0 0.0
    %1280 = vmatprep.subr.mxu0 0.0
    %1281 = vmatpush2.msra.mxu0 0.0
    %1282 = vmatprep.subr.mxu0 0.0
    %1283 = vmatpush2.msra.mxu0 0.0
    %1284 = vmatprep.subr.mxu0 0.0
    %1285 = vmatpush2.msra.mxu0 0.0
    %1286 = vmatprep.subr.mxu0 0.0
    %1287 = vmatpush2.msra.mxu0 0.0
    %1288 = vmatprep.subr.mxu0 0.0
    %1289 = vmatpush2.msra.mxu0 0.0
    %1290 = vmatprep.subr.mxu0 0.0
    %1291 = vmatpush2.msra.mxu0 0.0
    %1292 = vmatprep.subr.mxu0 0.0
    %1293 = vmatpush2.msra.mxu0 0.0
    %1294 = vmatprep.subr.mxu0 0.0
    %1295 = vmatpush2.msra.mxu0 0.0
    %1296 = vmatprep.mubr.f32.mxu0 0.0
    %1297 = vmatmul.mubr.f32.gmra.mxu0 %v1230
    %v1298 = vpop.f32.mrf.mxu0
    %v1299 = vadd.f32 0.0, %v1298
    %v1300 = vpop.f32.mrf.mxu0
    %1301 = vdwg.mxu0
    %v1302 = vadd.f32 %v382, %v1299
    %v1303 = vxor.u32 %v1302, 2147483648
    %v1304 = vmul.f32 %v1303, 1.442695
    %v1305 = vpow.pop %v1304
    %v1306 = vadd.f32 %v1305, 1.0
    %v1307 = vrcp.pop %v1306
    %v1308 = vmul.f32 1.0, %v1307
    %v1309 = vtanh.pop %v1302
    %v1310 = vmul.f32 %v1308, %v1117
    %1312 = vrot.lane.b32.xlu0 %v1309, 64
    %v1313 = vpop.permute.xlu0 %1312
    %v1315 = vmul.f32 %v1308, %v1313
    %1317 = vrot.lane.b32.xlu0 %v1315, 32
    %v1318 = vpop.permute.xlu0 %1317
    %v1320 = vadd.f32 %v1310, %v1318
    %v1321 = vtanh.pop %v1320
    %1323 = vrot.lane.b32.xlu0 %v1321, 64
    %v1324 = vpop.permute.xlu0 %1323
    %v1326 = vmul.f32 %v1308, %v1324
    %1328 = vrot.lane.b32.xlu0 %v1326, 32
    %v1329 = vpop.permute.xlu0 %1328
    %1332 = vrot.lane.b32.xlu0 %v1229, 64
    %v1333 = vpop.permute.xlu0 %1332
    %v1335 = vsel %vm419, %v1329, %v1333
    %v1337 = vsel %vm523, %v1335, 0
    %1339 = vmatprep.subr.mxu0 0.0
    %1340 = vmatpush1.msra.mxu0 0.0
    %1341 = vmatprep.subr.mxu0 0.0
    %1342 = vmatpush1.msra.mxu0 0.0
    %1343 = vmatprep.subr.mxu0 0.0
    %1344 = vmatpush1.msra.mxu0 0.0
    %1345 = vmatprep.subr.mxu0 0.0
    %1346 = vmatpush1.msra.mxu0 0.0
    %1347 = vmatprep.subr.mxu0 0.0
    %1348 = vmatpush1.msra.mxu0 0.0
    %1349 = vmatprep.subr.mxu0 0.0
    %1350 = vmatpush1.msra.mxu0 0.0
    %1351 = vmatprep.subr.mxu0 0.0
    %1352 = vmatpush1.msra.mxu0 0.0
    %1353 = vmatprep.subr.mxu0 0.0
    %1354 = vmatpush1.msra.mxu0 0.0
    %1355 = vmatprep.subr.mxu0 0.0
    %1356 = vmatpush1.msra.mxu0 %v411
    %1357 = vmatprep.subr.mxu0 0.0
    %1358 = vmatpush1.msra.mxu0 %v410
    %1359 = vmatprep.subr.mxu0 0.0
    %1360 = vmatpush1.msra.mxu0 %v409
    %1361 = vmatprep.subr.mxu0 0.0
    %1362 = vmatpush1.msra.mxu0 %v408
    %1363 = vmatprep.subr.mxu0 0.0
    %1364 = vmatpush1.msra.mxu0 %v407
    %1365 = vmatprep.subr.mxu0 0.0
    %1366 = vmatpush1.msra.mxu0 %v406
    %1367 = vmatprep.subr.mxu0 0.0
    %1368 = vmatpush1.msra.mxu0 %v405
    %1369 = vmatprep.subr.mxu0 0.0
    %1370 = vmatpush1.msra.mxu0 %v404
    %1371 = vmatprep.subr.mxu0 0.0
    %1372 = vmatpush2.msra.mxu0 0.0
    %1373 = vmatprep.subr.mxu0 0.0
    %1374 = vmatpush2.msra.mxu0 0.0
    %1375 = vmatprep.subr.mxu0 0.0
    %1376 = vmatpush2.msra.mxu0 0.0
    %1377 = vmatprep.subr.mxu0 0.0
    %1378 = vmatpush2.msra.mxu0 0.0
    %1379 = vmatprep.subr.mxu0 0.0
    %1380 = vmatpush2.msra.mxu0 0.0
    %1381 = vmatprep.subr.mxu0 0.0
    %1382 = vmatpush2.msra.mxu0 0.0
    %1383 = vmatprep.subr.mxu0 0.0
    %1384 = vmatpush2.msra.mxu0 0.0
    %1385 = vmatprep.subr.mxu0 0.0
    %1386 = vmatpush2.msra.mxu0 0.0
    %1387 = vmatprep.subr.mxu0 0.0
    %1388 = vmatpush2.msra.mxu0 0.0
    %1389 = vmatprep.subr.mxu0 0.0
    %1390 = vmatpush2.msra.mxu0 0.0
    %1391 = vmatprep.subr.mxu0 0.0
    %1392 = vmatpush2.msra.mxu0 0.0
    %1393 = vmatprep.subr.mxu0 0.0
    %1394 = vmatpush2.msra.mxu0 0.0
    %1395 = vmatprep.subr.mxu0 0.0
    %1396 = vmatpush2.msra.mxu0 0.0
    %1397 = vmatprep.subr.mxu0 0.0
    %1398 = vmatpush2.msra.mxu0 0.0
    %1399 = vmatprep.subr.mxu0 0.0
    %1400 = vmatpush2.msra.mxu0 0.0
    %1401 = vmatprep.subr.mxu0 0.0
    %1402 = vmatpush2.msra.mxu0 0.0
    %1403 = vmatprep.mubr.f32.mxu0 0.0
    %1404 = vmatmul.mubr.f32.gmra.mxu0 %v1337
    %v1405 = vpop.f32.mrf.mxu0
    %v1406 = vadd.f32 %v417, %v1405
    %v1407 = vpop.f32.mrf.mxu0
    %1408 = vdwg.mxu0
    %v1409 = vxor.u32 %v1406, 2147483648
    %v1410 = vmul.f32 %v1409, 1.442695
    %v1411 = vpow.pop %v1410
    %v1412 = vadd.f32 %v1411, 1.0
    %v1413 = vrcp.pop %v1412
    %v1414 = vmul.f32 1.0, %v1413
    %v1415 = vtanh.pop %v1406
    %v1416 = vmul.f32 %v1414, %v1223
    %1418 = vrot.lane.b32.xlu0 %v1415, 64
    %v1419 = vpop.permute.xlu0 %1418
    %v1421 = vmul.f32 %v1414, %v1419
    %1423 = vrot.lane.b32.xlu0 %v1421, 32
    %v1424 = vpop.permute.xlu0 %1423
    %v1426 = vadd.f32 %v1416, %v1424
    %v1427 = vtanh.pop %v1426
    %1429 = vrot.lane.b32.xlu0 %v1427, 64
    %v1430 = vpop.permute.xlu0 %1429
    %v1432 = vmul.f32 %v1414, %v1430
    %v1433 = vsel %vm419, %v1329, 0
    %1435 = vmatprep.subr.mxu0 0.0
    %1436 = vmatpush1.msra.mxu0 0.0
    %1437 = vmatprep.subr.mxu0 0.0
    %1438 = vmatpush1.msra.mxu0 0.0
    %1439 = vmatprep.subr.mxu0 0.0
    %1440 = vmatpush1.msra.mxu0 0.0
    %1441 = vmatprep.subr.mxu0 0.0
    %1442 = vmatpush1.msra.mxu0 0.0
    %1443 = vmatprep.subr.mxu0 0.0
    %1444 = vmatpush1.msra.mxu0 0.0
    %1445 = vmatprep.subr.mxu0 0.0
    %1446 = vmatpush1.msra.mxu0 0.0
    %1447 = vmatprep.subr.mxu0 0.0
    %1448 = vmatpush1.msra.mxu0 0.0
    %1449 = vmatprep.subr.mxu0 0.0
    %1450 = vmatpush1.msra.mxu0 0.0
    %1451 = vmatprep.subr.mxu0 0.0
    %1452 = vmatpush1.msra.mxu0 0.0
    %1453 = vmatprep.subr.mxu0 0.0
    %1454 = vmatpush1.msra.mxu0 0.0
    %1455 = vmatprep.subr.mxu0 0.0
    %1456 = vmatpush1.msra.mxu0 0.0
    %1457 = vmatprep.subr.mxu0 0.0
    %1458 = vmatpush1.msra.mxu0 0.0
    %1459 = vmatprep.subr.mxu0 0.0
    %1460 = vmatpush1.msra.mxu0 %v403
    %1461 = vmatprep.subr.mxu0 0.0
    %1462 = vmatpush1.msra.mxu0 %v402
    %1463 = vmatprep.subr.mxu0 0.0
    %1464 = vmatpush1.msra.mxu0 %v401
    %1465 = vmatprep.subr.mxu0 0.0
    %1466 = vmatpush1.msra.mxu0 %v400
    %1467 = vmatprep.subr.mxu0 0.0
    %1468 = vmatpush2.msra.mxu0 0.0
    %1469 = vmatprep.subr.mxu0 0.0
    %1470 = vmatpush2.msra.mxu0 0.0
    %1471 = vmatprep.subr.mxu0 0.0
    %1472 = vmatpush2.msra.mxu0 0.0
    %1473 = vmatprep.subr.mxu0 0.0
    %1474 = vmatpush2.msra.mxu0 0.0
    %1475 = vmatprep.subr.mxu0 0.0
    %1476 = vmatpush2.msra.mxu0 0.0
    %1477 = vmatprep.subr.mxu0 0.0
    %1478 = vmatpush2.msra.mxu0 0.0
    %1479 = vmatprep.subr.mxu0 0.0
    %1480 = vmatpush2.msra.mxu0 0.0
    %1481 = vmatprep.subr.mxu0 0.0
    %1482 = vmatpush2.msra.mxu0 0.0
    %1483 = vmatprep.subr.mxu0 0.0
    %1484 = vmatpush2.msra.mxu0 0.0
    %1485 = vmatprep.subr.mxu0 0.0
    %1486 = vmatpush2.msra.mxu0 0.0
    %1487 = vmatprep.subr.mxu0 0.0
    %1488 = vmatpush2.msra.mxu0 0.0
    %1489 = vmatprep.subr.mxu0 0.0
    %1490 = vmatpush2.msra.mxu0 0.0
    %1491 = vmatprep.subr.mxu0 0.0
    %1492 = vmatpush2.msra.mxu0 0.0
    %1493 = vmatprep.subr.mxu0 0.0
    %1494 = vmatpush2.msra.mxu0 0.0
    %1495 = vmatprep.subr.mxu0 0.0
    %1496 = vmatpush2.msra.mxu0 0.0
    %1497 = vmatprep.subr.mxu0 0.0
    %1498 = vmatpush2.msra.mxu0 0.0
    %1499 = vmatprep.mubr.f32.mxu0 0.0
    %1500 = vmatmul.mubr.f32.gmra.mxu0 %v1433
    %v1501 = vpop.f32.mrf.mxu0
    %v1502 = vadd.f32 0.0, %v1501
    %v1503 = vpop.f32.mrf.mxu0
    %1504 = vdwg.mxu0
    %v1505 = vadd.f32 %v387, %v1502
    %v1506 = vxor.u32 %v1505, 2147483648
    %v1507 = vmul.f32 %v1506, 1.442695
    %v1508 = vpow.pop %v1507
    %v1509 = vadd.f32 %v1508, 1.0
    %v1510 = vrcp.pop %v1509
    %v1511 = vmul.f32 1.0, %v1510
    %v1512 = vtanh.pop %v1505
    %v1513 = vmul.f32 %v1511, %v1320
    %1515 = vrot.lane.b32.xlu0 %v1512, 64
    %v1516 = vpop.permute.xlu0 %1515
    %v1518 = vmul.f32 %v1511, %v1516
    %1520 = vrot.lane.b32.xlu0 %v1518, 32
    %v1521 = vpop.permute.xlu0 %1520
    %v1523 = vadd.f32 %v1513, %v1521
    %v1524 = vtanh.pop %v1523
    %1526 = vrot.lane.b32.xlu0 %v1524, 64
    %v1527 = vpop.permute.xlu0 %1526
    %v1529 = vmul.f32 %v1511, %v1527
    %1531 = vrot.lane.b32.xlu0 %v1529, 32
    %v1532 = vpop.permute.xlu0 %1531
    %1535 = vrot.lane.b32.xlu0 %v1432, 64
    %v1536 = vpop.permute.xlu0 %1535
    %v1538 = vsel %vm419, %v1532, %v1536
    %v1540 = vsel %vm523, %v1538, 0
    %1542 = vmatprep.subr.mxu0 0.0
    %1543 = vmatpush1.msra.mxu0 0.0
    %1544 = vmatprep.subr.mxu0 0.0
    %1545 = vmatpush1.msra.mxu0 0.0
    %1546 = vmatprep.subr.mxu0 0.0
    %1547 = vmatpush1.msra.mxu0 0.0
    %1548 = vmatprep.subr.mxu0 0.0
    %1549 = vmatpush1.msra.mxu0 0.0
    %1550 = vmatprep.subr.mxu0 0.0
    %1551 = vmatpush1.msra.mxu0 0.0
    %1552 = vmatprep.subr.mxu0 0.0
    %1553 = vmatpush1.msra.mxu0 0.0
    %1554 = vmatprep.subr.mxu0 0.0
    %1555 = vmatpush1.msra.mxu0 0.0
    %1556 = vmatprep.subr.mxu0 0.0
    %1557 = vmatpush1.msra.mxu0 0.0
    %1558 = vmatprep.subr.mxu0 0.0
    %1559 = vmatpush1.msra.mxu0 %v411
    %1560 = vmatprep.subr.mxu0 0.0
    %1561 = vmatpush1.msra.mxu0 %v410
    %1562 = vmatprep.subr.mxu0 0.0
    %1563 = vmatpush1.msra.mxu0 %v409
    %1564 = vmatprep.subr.mxu0 0.0
    %1565 = vmatpush1.msra.mxu0 %v408
    %1566 = vmatprep.subr.mxu0 0.0
    %1567 = vmatpush1.msra.mxu0 %v407
    %1568 = vmatprep.subr.mxu0 0.0
    %1569 = vmatpush1.msra.mxu0 %v406
    %1570 = vmatprep.subr.mxu0 0.0
    %1571 = vmatpush1.msra.mxu0 %v405
    %1572 = vmatprep.subr.mxu0 0.0
    %1573 = vmatpush1.msra.mxu0 %v404
    %1574 = vmatprep.subr.mxu0 0.0
    %1575 = vmatpush2.msra.mxu0 0.0
    %1576 = vmatprep.subr.mxu0 0.0
    %1577 = vmatpush2.msra.mxu0 0.0
    %1578 = vmatprep.subr.mxu0 0.0
    %1579 = vmatpush2.msra.mxu0 0.0
    %1580 = vmatprep.subr.mxu0 0.0
    %1581 = vmatpush2.msra.mxu0 0.0
    %1582 = vmatprep.subr.mxu0 0.0
    %1583 = vmatpush2.msra.mxu0 0.0
    %1584 = vmatprep.subr.mxu0 0.0
    %1585 = vmatpush2.msra.mxu0 0.0
    %1586 = vmatprep.subr.mxu0 0.0
    %1587 = vmatpush2.msra.mxu0 0.0
    %1588 = vmatprep.subr.mxu0 0.0
    %1589 = vmatpush2.msra.mxu0 0.0
    %1590 = vmatprep.subr.mxu0 0.0
    %1591 = vmatpush2.msra.mxu0 0.0
    %1592 = vmatprep.subr.mxu0 0.0
    %1593 = vmatpush2.msra.mxu0 0.0
    %1594 = vmatprep.subr.mxu0 0.0
    %1595 = vmatpush2.msra.mxu0 0.0
    %1596 = vmatprep.subr.mxu0 0.0
    %1597 = vmatpush2.msra.mxu0 0.0
    %1598 = vmatprep.subr.mxu0 0.0
    %1599 = vmatpush2.msra.mxu0 0.0
    %1600 = vmatprep.subr.mxu0 0.0
    %1601 = vmatpush2.msra.mxu0 0.0
    %1602 = vmatprep.subr.mxu0 0.0
    %1603 = vmatpush2.msra.mxu0 0.0
    %1604 = vmatprep.subr.mxu0 0.0
    %1605 = vmatpush2.msra.mxu0 0.0
    %1606 = vmatprep.mubr.f32.mxu0 0.0
    %1607 = vmatmul.mubr.f32.gmra.mxu0 %v1540
    %v1608 = vpop.f32.mrf.mxu0
    %v1609 = vadd.f32 %v417, %v1608
    %v1610 = vpop.f32.mrf.mxu0
    %1611 = vdwg.mxu0
    %v1612 = vxor.u32 %v1609, 2147483648
    %v1613 = vmul.f32 %v1612, 1.442695
    %v1614 = vpow.pop %v1613
    %v1615 = vadd.f32 %v1614, 1.0
    %v1616 = vrcp.pop %v1615
    %v1617 = vmul.f32 1.0, %v1616
    %v1618 = vtanh.pop %v1609
    %v1619 = vmul.f32 %v1617, %v1426
    %1621 = vrot.lane.b32.xlu0 %v1618, 64
    %v1622 = vpop.permute.xlu0 %1621
    %v1624 = vmul.f32 %v1617, %v1622
    %1626 = vrot.lane.b32.xlu0 %v1624, 32
    %v1627 = vpop.permute.xlu0 %1626
    %v1629 = vadd.f32 %v1619, %v1627
    %v1630 = vtanh.pop %v1629
    %1632 = vrot.lane.b32.xlu0 %v1630, 64
    %v1633 = vpop.permute.xlu0 %1632
    %v1635 = vmul.f32 %v1617, %v1633
    %v1636 = vsel %vm419, %v1532, 0
    %1638 = vmatprep.subr.mxu0 0.0
    %1639 = vmatpush1.msra.mxu0 0.0
    %1640 = vmatprep.subr.mxu0 0.0
    %1641 = vmatpush1.msra.mxu0 0.0
    %1642 = vmatprep.subr.mxu0 0.0
    %1643 = vmatpush1.msra.mxu0 0.0
    %1644 = vmatprep.subr.mxu0 0.0
    %1645 = vmatpush1.msra.mxu0 0.0
    %1646 = vmatprep.subr.mxu0 0.0
    %1647 = vmatpush1.msra.mxu0 0.0
    %1648 = vmatprep.subr.mxu0 0.0
    %1649 = vmatpush1.msra.mxu0 0.0
    %1650 = vmatprep.subr.mxu0 0.0
    %1651 = vmatpush1.msra.mxu0 0.0
    %1652 = vmatprep.subr.mxu0 0.0
    %1653 = vmatpush1.msra.mxu0 0.0
    %1654 = vmatprep.subr.mxu0 0.0
    %1655 = vmatpush1.msra.mxu0 0.0
    %1656 = vmatprep.subr.mxu0 0.0
    %1657 = vmatpush1.msra.mxu0 0.0
    %1658 = vmatprep.subr.mxu0 0.0
    %1659 = vmatpush1.msra.mxu0 0.0
    %1660 = vmatprep.subr.mxu0 0.0
    %1661 = vmatpush1.msra.mxu0 0.0
    %1662 = vmatprep.subr.mxu0 0.0
    %1663 = vmatpush1.msra.mxu0 %v403
    %1664 = vmatprep.subr.mxu0 0.0
    %1665 = vmatpush1.msra.mxu0 %v402
    %1666 = vmatprep.subr.mxu0 0.0
    %1667 = vmatpush1.msra.mxu0 %v401
    %1668 = vmatprep.subr.mxu0 0.0
    %1669 = vmatpush1.msra.mxu0 %v400
    %1670 = vmatprep.subr.mxu0 0.0
    %1671 = vmatpush2.msra.mxu0 0.0
    %1672 = vmatprep.subr.mxu0 0.0
    %1673 = vmatpush2.msra.mxu0 0.0
    %1674 = vmatprep.subr.mxu0 0.0
    %1675 = vmatpush2.msra.mxu0 0.0
    %1676 = vmatprep.subr.mxu0 0.0
    %1677 = vmatpush2.msra.mxu0 0.0
    %1678 = vmatprep.subr.mxu0 0.0
    %1679 = vmatpush2.msra.mxu0 0.0
    %1680 = vmatprep.subr.mxu0 0.0
    %1681 = vmatpush2.msra.mxu0 0.0
    %1682 = vmatprep.subr.mxu0 0.0
    %1683 = vmatpush2.msra.mxu0 0.0
    %1684 = vmatprep.subr.mxu0 0.0
    %1685 = vmatpush2.msra.mxu0 0.0
    %1686 = vmatprep.subr.mxu0 0.0
    %1687 = vmatpush2.msra.mxu0 0.0
    %1688 = vmatprep.subr.mxu0 0.0
    %1689 = vmatpush2.msra.mxu0 0.0
    %1690 = vmatprep.subr.mxu0 0.0
    %1691 = vmatpush2.msra.mxu0 0.0
    %1692 = vmatprep.subr.mxu0 0.0
    %1693 = vmatpush2.msra.mxu0 0.0
    %1694 = vmatprep.subr.mxu0 0.0
    %1695 = vmatpush2.msra.mxu0 0.0
    %1696 = vmatprep.subr.mxu0 0.0
    %1697 = vmatpush2.msra.mxu0 0.0
    %1698 = vmatprep.subr.mxu0 0.0
    %1699 = vmatpush2.msra.mxu0 0.0
    %1700 = vmatprep.subr.mxu0 0.0
    %1701 = vmatpush2.msra.mxu0 0.0
    %1702 = vmatprep.mubr.f32.mxu0 0.0
    %1703 = vmatmul.mubr.f32.gmra.mxu0 %v1636
    %v1704 = vpop.f32.mrf.mxu0
    %v1705 = vadd.f32 0.0, %v1704
    %v1706 = vpop.f32.mrf.mxu0
    %1707 = vdwg.mxu0
    %v1708 = vadd.f32 %v392, %v1705
    %v1709 = vxor.u32 %v1708, 2147483648
    %v1710 = vmul.f32 %v1709, 1.442695
    %v1711 = vpow.pop %v1710
    %v1712 = vadd.f32 %v1711, 1.0
    %v1713 = vrcp.pop %v1712
    %v1714 = vmul.f32 1.0, %v1713
    %v1715 = vtanh.pop %v1708
    %v1716 = vmul.f32 %v1714, %v1523
    %1718 = vrot.lane.b32.xlu0 %v1715, 64
    %v1719 = vpop.permute.xlu0 %1718
    %v1721 = vmul.f32 %v1714, %v1719
    %1723 = vrot.lane.b32.xlu0 %v1721, 32
    %v1724 = vpop.permute.xlu0 %1723
    %v1726 = vadd.f32 %v1716, %v1724
    %v1727 = vtanh.pop %v1726
    %1729 = vrot.lane.b32.xlu0 %v1727, 64
    %v1730 = vpop.permute.xlu0 %1729
    %v1732 = vmul.f32 %v1714, %v1730
    %1734 = vrot.lane.b32.xlu0 %v1732, 32
    %v1735 = vpop.permute.xlu0 %1734
    %1738 = vrot.lane.b32.xlu0 %v1635, 64
    %v1739 = vpop.permute.xlu0 %1738
    %v1741 = vsel %vm419, %v1735, %v1739
    %v1743 = vsel %vm523, %v1741, 0
    %1745 = vmatprep.subr.mxu0 0.0
    %1746 = vmatpush1.msra.mxu0 0.0
    %1747 = vmatprep.subr.mxu0 0.0
    %1748 = vmatpush1.msra.mxu0 0.0
    %1749 = vmatprep.subr.mxu0 0.0
    %1750 = vmatpush1.msra.mxu0 0.0
    %1751 = vmatprep.subr.mxu0 0.0
    %1752 = vmatpush1.msra.mxu0 0.0
    %1753 = vmatprep.subr.mxu0 0.0
    %1754 = vmatpush1.msra.mxu0 0.0
    %1755 = vmatprep.subr.mxu0 0.0
    %1756 = vmatpush1.msra.mxu0 0.0
    %1757 = vmatprep.subr.mxu0 0.0
    %1758 = vmatpush1.msra.mxu0 0.0
    %1759 = vmatprep.subr.mxu0 0.0
    %1760 = vmatpush1.msra.mxu0 0.0
    %1761 = vmatprep.subr.mxu0 0.0
    %1762 = vmatpush1.msra.mxu0 %v411
    %1763 = vmatprep.subr.mxu0 0.0
    %1764 = vmatpush1.msra.mxu0 %v410
    %1765 = vmatprep.subr.mxu0 0.0
    %1766 = vmatpush1.msra.mxu0 %v409
    %1767 = vmatprep.subr.mxu0 0.0
    %1768 = vmatpush1.msra.mxu0 %v408
    %1769 = vmatprep.subr.mxu0 0.0
    %1770 = vmatpush1.msra.mxu0 %v407
    %1771 = vmatprep.subr.mxu0 0.0
    %1772 = vmatpush1.msra.mxu0 %v406
    %1773 = vmatprep.subr.mxu0 0.0
    %1774 = vmatpush1.msra.mxu0 %v405
    %1775 = vmatprep.subr.mxu0 0.0
    %1776 = vmatpush1.msra.mxu0 %v404
    %1777 = vmatprep.subr.mxu0 0.0
    %1778 = vmatpush2.msra.mxu0 0.0
    %1779 = vmatprep.subr.mxu0 0.0
    %1780 = vmatpush2.msra.mxu0 0.0
    %1781 = vmatprep.subr.mxu0 0.0
    %1782 = vmatpush2.msra.mxu0 0.0
    %1783 = vmatprep.subr.mxu0 0.0
    %1784 = vmatpush2.msra.mxu0 0.0
    %1785 = vmatprep.subr.mxu0 0.0
    %1786 = vmatpush2.msra.mxu0 0.0
    %1787 = vmatprep.subr.mxu0 0.0
    %1788 = vmatpush2.msra.mxu0 0.0
    %1789 = vmatprep.subr.mxu0 0.0
    %1790 = vmatpush2.msra.mxu0 0.0
    %1791 = vmatprep.subr.mxu0 0.0
    %1792 = vmatpush2.msra.mxu0 0.0
    %1793 = vmatprep.subr.mxu0 0.0
    %1794 = vmatpush2.msra.mxu0 0.0
    %1795 = vmatprep.subr.mxu0 0.0
    %1796 = vmatpush2.msra.mxu0 0.0
    %1797 = vmatprep.subr.mxu0 0.0
    %1798 = vmatpush2.msra.mxu0 0.0
    %1799 = vmatprep.subr.mxu0 0.0
    %1800 = vmatpush2.msra.mxu0 0.0
    %1801 = vmatprep.subr.mxu0 0.0
    %1802 = vmatpush2.msra.mxu0 0.0
    %1803 = vmatprep.subr.mxu0 0.0
    %1804 = vmatpush2.msra.mxu0 0.0
    %1805 = vmatprep.subr.mxu0 0.0
    %1806 = vmatpush2.msra.mxu0 0.0
    %1807 = vmatprep.subr.mxu0 0.0
    %1808 = vmatpush2.msra.mxu0 0.0
    %1809 = vmatprep.mubr.f32.mxu0 0.0
    %1810 = vmatmul.mubr.f32.gmra.mxu0 %v1743
    %v1811 = vpop.f32.mrf.mxu0
    %v1812 = vadd.f32 %v417, %v1811
    %v1813 = vpop.f32.mrf.mxu0
    %1814 = vdwg.mxu0
    %v1815 = vxor.u32 %v1812, 2147483648
    %v1816 = vmul.f32 %v1815, 1.442695
    %v1817 = vpow.pop %v1816
    %v1818 = vadd.f32 %v1817, 1.0
    %v1819 = vrcp.pop %v1818
    %v1820 = vmul.f32 1.0, %v1819
    %v1821 = vtanh.pop %v1812
    %v1822 = vmul.f32 %v1820, %v1629
    %1824 = vrot.lane.b32.xlu0 %v1821, 64
    %v1825 = vpop.permute.xlu0 %1824
    %v1827 = vmul.f32 %v1820, %v1825
    %1829 = vrot.lane.b32.xlu0 %v1827, 32
    %v1830 = vpop.permute.xlu0 %1829
    %v1832 = vadd.f32 %v1822, %v1830
    %v1833 = vtanh.pop %v1832
    %1835 = vrot.lane.b32.xlu0 %v1833, 64
    %v1836 = vpop.permute.xlu0 %1835
    %v1838 = vmul.f32 %v1820, %v1836
    %v1839 = vsel %vm419, %v1735, 0
    %1841 = vmatprep.subr.mxu0 0.0
    %1842 = vmatpush1.msra.mxu0 0.0
    %1843 = vmatprep.subr.mxu0 0.0
    %1844 = vmatpush1.msra.mxu0 0.0
    %1845 = vmatprep.subr.mxu0 0.0
    %1846 = vmatpush1.msra.mxu0 0.0
    %1847 = vmatprep.subr.mxu0 0.0
    %1848 = vmatpush1.msra.mxu0 0.0
    %1849 = vmatprep.subr.mxu0 0.0
    %1850 = vmatpush1.msra.mxu0 0.0
    %1851 = vmatprep.subr.mxu0 0.0
    %1852 = vmatpush1.msra.mxu0 0.0
    %1853 = vmatprep.subr.mxu0 0.0
    %1854 = vmatpush1.msra.mxu0 0.0
    %1855 = vmatprep.subr.mxu0 0.0
    %1856 = vmatpush1.msra.mxu0 0.0
    %1857 = vmatprep.subr.mxu0 0.0
    %1858 = vmatpush1.msra.mxu0 0.0
    %1859 = vmatprep.subr.mxu0 0.0
    %1860 = vmatpush1.msra.mxu0 0.0
    %1861 = vmatprep.subr.mxu0 0.0
    %1862 = vmatpush1.msra.mxu0 0.0
    %1863 = vmatprep.subr.mxu0 0.0
    %1864 = vmatpush1.msra.mxu0 0.0
    %1865 = vmatprep.subr.mxu0 0.0
    %1866 = vmatpush1.msra.mxu0 %v403
    %1867 = vmatprep.subr.mxu0 0.0
    %1868 = vmatpush1.msra.mxu0 %v402
    %1869 = vmatprep.subr.mxu0 0.0
    %1870 = vmatpush1.msra.mxu0 %v401
    %1871 = vmatprep.subr.mxu0 0.0
    %1872 = vmatpush1.msra.mxu0 %v400
    %1873 = vmatprep.subr.mxu0 0.0
    %1874 = vmatpush2.msra.mxu0 0.0
    %1875 = vmatprep.subr.mxu0 0.0
    %1876 = vmatpush2.msra.mxu0 0.0
    %1877 = vmatprep.subr.mxu0 0.0
    %1878 = vmatpush2.msra.mxu0 0.0
    %1879 = vmatprep.subr.mxu0 0.0
    %1880 = vmatpush2.msra.mxu0 0.0
    %1881 = vmatprep.subr.mxu0 0.0
    %1882 = vmatpush2.msra.mxu0 0.0
    %1883 = vmatprep.subr.mxu0 0.0
    %1884 = vmatpush2.msra.mxu0 0.0
    %1885 = vmatprep.subr.mxu0 0.0
    %1886 = vmatpush2.msra.mxu0 0.0
    %1887 = vmatprep.subr.mxu0 0.0
    %1888 = vmatpush2.msra.mxu0 0.0
    %1889 = vmatprep.subr.mxu0 0.0
    %1890 = vmatpush2.msra.mxu0 0.0
    %1891 = vmatprep.subr.mxu0 0.0
    %1892 = vmatpush2.msra.mxu0 0.0
    %1893 = vmatprep.subr.mxu0 0.0
    %1894 = vmatpush2.msra.mxu0 0.0
    %1895 = vmatprep.subr.mxu0 0.0
    %1896 = vmatpush2.msra.mxu0 0.0
    %1897 = vmatprep.subr.mxu0 0.0
    %1898 = vmatpush2.msra.mxu0 0.0
    %1899 = vmatprep.subr.mxu0 0.0
    %1900 = vmatpush2.msra.mxu0 0.0
    %1901 = vmatprep.subr.mxu0 0.0
    %1902 = vmatpush2.msra.mxu0 0.0
    %1903 = vmatprep.subr.mxu0 0.0
    %1904 = vmatpush2.msra.mxu0 0.0
    %1905 = vmatprep.mubr.f32.mxu0 0.0
    %1906 = vmatmul.mubr.f32.gmra.mxu0 %v1839
    %v1907 = vpop.f32.mrf.mxu0
    %v1908 = vadd.f32 0.0, %v1907
    %v1909 = vpop.f32.mrf.mxu0
    %1910 = vdwg.mxu0
    %v1911 = vadd.f32 %v397, %v1908
    %v1912 = vxor.u32 %v1911, 2147483648
    %v1913 = vmul.f32 %v1912, 1.442695
    %v1914 = vpow.pop %v1913
    %v1915 = vadd.f32 %v1914, 1.0
    %v1916 = vrcp.pop %v1915
    %v1917 = vmul.f32 1.0, %v1916
    %v1918 = vtanh.pop %v1911
    %v1919 = vmul.f32 %v1917, %v1726
    %1921 = vrot.lane.b32.xlu0 %v1918, 64
    %v1922 = vpop.permute.xlu0 %1921
    %v1924 = vmul.f32 %v1917, %v1922
    %1926 = vrot.lane.b32.xlu0 %v1924, 32
    %v1927 = vpop.permute.xlu0 %1926
    %v1929 = vadd.f32 %v1919, %v1927
    %v1930 = vtanh.pop %v1929
    %1932 = vrot.lane.b32.xlu0 %v1930, 64
    %v1933 = vpop.permute.xlu0 %1932
    %v1935 = vmul.f32 %v1917, %v1933
    %1937 = vrot.lane.b32.xlu0 %v1935, 32
    %v1938 = vpop.permute.xlu0 %1937
    %1941 = vrot.lane.b32.xlu0 %v1838, 64
    %v1942 = vpop.permute.xlu0 %1941
    %v1944 = vsel %vm419, %v1938, %v1942
    %v1946 = vsel %vm523, %v1944, 0
    %1948 = vmatprep.subr.mxu0 0.0
    %1949 = vmatpush1.msra.mxu0 0.0
    %1950 = vmatprep.subr.mxu0 0.0
    %1951 = vmatpush1.msra.mxu0 0.0
    %1952 = vmatprep.subr.mxu0 0.0
    %1953 = vmatpush1.msra.mxu0 0.0
    %1954 = vmatprep.subr.mxu0 0.0
    %1955 = vmatpush1.msra.mxu0 0.0
    %1956 = vmatprep.subr.mxu0 0.0
    %1957 = vmatpush1.msra.mxu0 0.0
    %1958 = vmatprep.subr.mxu0 0.0
    %1959 = vmatpush1.msra.mxu0 0.0
    %1960 = vmatprep.subr.mxu0 0.0
    %1961 = vmatpush1.msra.mxu0 0.0
    %1962 = vmatprep.subr.mxu0 0.0
    %1963 = vmatpush1.msra.mxu0 0.0
    %1964 = vmatprep.subr.mxu0 0.0
    %1965 = vmatpush1.msra.mxu0 %v411
    %1966 = vmatprep.subr.mxu0 0.0
    %1967 = vmatpush1.msra.mxu0 %v410
    %1968 = vmatprep.subr.mxu0 0.0
    %1969 = vmatpush1.msra.mxu0 %v409
    %1970 = vmatprep.subr.mxu0 0.0
    %1971 = vmatpush1.msra.mxu0 %v408
    %1972 = vmatprep.subr.mxu0 0.0
    %1973 = vmatpush1.msra.mxu0 %v407
    %1974 = vmatprep.subr.mxu0 0.0
    %1975 = vmatpush1.msra.mxu0 %v406
    %1976 = vmatprep.subr.mxu0 0.0
    %1977 = vmatpush1.msra.mxu0 %v405
    %1978 = vmatprep.subr.mxu0 0.0
    %1979 = vmatpush1.msra.mxu0 %v404
    %1980 = vmatprep.subr.mxu0 0.0
    %1981 = vmatpush2.msra.mxu0 0.0
    %1982 = vmatprep.subr.mxu0 0.0
    %1983 = vmatpush2.msra.mxu0 0.0
    %1984 = vmatprep.subr.mxu0 0.0
    %1985 = vmatpush2.msra.mxu0 0.0
    %1986 = vmatprep.subr.mxu0 0.0
    %1987 = vmatpush2.msra.mxu0 0.0
    %1988 = vmatprep.subr.mxu0 0.0
    %1989 = vmatpush2.msra.mxu0 0.0
    %1990 = vmatprep.subr.mxu0 0.0
    %1991 = vmatpush2.msra.mxu0 0.0
    %1992 = vmatprep.subr.mxu0 0.0
    %1993 = vmatpush2.msra.mxu0 0.0
    %1994 = vmatprep.subr.mxu0 0.0
    %1995 = vmatpush2.msra.mxu0 0.0
    %1996 = vmatprep.subr.mxu0 0.0
    %1997 = vmatpush2.msra.mxu0 0.0
    %1998 = vmatprep.subr.mxu0 0.0
    %1999 = vmatpush2.msra.mxu0 0.0
    %2000 = vmatprep.subr.mxu0 0.0
    %2001 = vmatpush2.msra.mxu0 0.0
    %2002 = vmatprep.subr.mxu0 0.0
    %2003 = vmatpush2.msra.mxu0 0.0
    %2004 = vmatprep.subr.mxu0 0.0
    %2005 = vmatpush2.msra.mxu0 0.0
    %2006 = vmatprep.subr.mxu0 0.0
    %2007 = vmatpush2.msra.mxu0 0.0
    %2008 = vmatprep.subr.mxu0 0.0
    %2009 = vmatpush2.msra.mxu0 0.0
    %2010 = vmatprep.subr.mxu0 0.0
    %2011 = vmatpush2.msra.mxu0 0.0
    %2012 = vmatprep.mubr.f32.mxu0 0.0
    %2013 = vmatmul.mubr.f32.gmra.mxu0 %v1946
    %v2014 = vpop.f32.mrf.mxu0
    %v2015 = vadd.f32 %v417, %v2014
    %v2016 = vpop.f32.mrf.mxu0
    %2017 = vdwg.mxu0
    %v2018 = vxor.u32 %v2015, 2147483648
    %v2019 = vmul.f32 %v2018, 1.442695
    %v2020 = vpow.pop %v2019
    %v2021 = vadd.f32 %v2020, 1.0
    %v2022 = vrcp.pop %v2021
    %v2023 = vmul.f32 1.0, %v2022
    %v2024 = vtanh.pop %v2015
    %v2025 = vmul.f32 %v2023, %v1832
    %2027 = vrot.lane.b32.xlu0 %v2024, 64
    %v2028 = vpop.permute.xlu0 %2027
    %v2030 = vmul.f32 %v2023, %v2028
    %2032 = vrot.lane.b32.xlu0 %v2030, 32
    %v2033 = vpop.permute.xlu0 %2032
    %v2035 = vadd.f32 %v2025, %v2033
    %2037 = vrot.lane.b32.xlu0 %v1929, 96
    %v2038 = vpop.permute.xlu0 %2037
    %v2040 = vsel %vm419, %v2038, %v2035
    %2041 = vst.msk [vmem:[%s5] sm:$0xff] %vm523, %v2040
    // Predicated region
    $region26: #{_forward_impl.1} parent=1 // pred_check
      _
    $region27: #{_forward_impl.1} parent=1 // pred_check_branch
      %2043 = sbr.rel (0) target = $region29
    $region28: #{_forward_impl.1} parent=1 // pred_region
      _
    $region29: #{_forward_impl.1} parent=1 // pred_fallthru
      _
    // Predicated region
    $region30: #{_forward_impl.1} parent=1 // pred_check
      _
    $region31: #{_forward_impl.1} parent=1 // pred_check_branch
      %2045 = sbr.rel (0) target = $region33
    $region32: #{_forward_impl.1} parent=1 // pred_region
      _
    $region33: #{_forward_impl.1} parent=1 // pred_fallthru
      _
    %2046 = vsyncpa [#allocation3], 1

</llo_original>
